<compile_context>
chip_gen: v7x
topology: tpu7x:2x2x1
jax: 0.10.0
libtpu: 0.0.40
codegen_flags: <defaults>
</compile_context>

<pallas_src>
import jax
import jax.numpy as jnp
from jax.experimental import pallas as pl
from jax.experimental.pallas import tpu as pltpu

# Model hyper-parameters (from the PyTorch module)
HIDDEN_SIZE = 2
INPUT_SIZE = 5
NUM_CLASSES = 1
NUM_LAYERS = 1  # single-layer LSTM (recurrence hard-coded for 1 layer)
FC1_OUT = 128


def lstm1_kernel(x_ref, w_ih_ref, w_hh_ref, b_ref,
                 w1_ref, b1_ref, w2_ref, b2_ref, out_ref):
    """Full forward pass for one batch tile, batch-on-lanes layout.

    x_ref   : (T, I, TB)   time-major input tile, batch on the lane axis
    w_ih_ref: (4H, I)      input->gates weights (PyTorch layout)
    w_hh_ref: (4H, H)      hidden->gates weights (PyTorch layout)
    b_ref   : (4H, 1)      fused bias column (b_ih + b_hh)
    w1_ref  : (128, H)     fc_1 weights (PyTorch layout)
    b1_ref  : (128, 1)
    w2_ref  : (1, 128)     fc weights (PyTorch layout: (out=1, in=128))
    b2_ref  : (1, 1)
    out_ref : (1, TB)      lane-dense output (batch on the lane axis)
    """
    T, I, TB = x_ref.shape
    G = w_ih_ref.shape[0]          # 4H
    H = w_hh_ref.shape[1]
    F = w1_ref.shape[0]            # 128

    # ---- Hoisted lane-broadcasts of the tiny weight columns (once per tile,
    # outside the serial recurrence; JAX does not CSE broadcast_in_dim). ----
    w_ih = w_ih_ref[...]                                                    # (4H, I)
    w_hh = w_hh_ref[...]                                                    # (4H, H)
    wih_b = [jnp.broadcast_to(w_ih[:, i:i + 1], (G, TB)) for i in range(I)]
    whh_b = [jnp.broadcast_to(w_hh[:, k:k + 1], (G, TB)) for k in range(H)]
    bias_b = jnp.broadcast_to(b_ref[...], (G, TB))                          # (4H, TB)

    h = jnp.zeros((H, TB), jnp.float32)
    c = jnp.zeros((H, TB), jnp.float32)

    # ---- Recurrence, fully unrolled (T is static).  Pure VPU work on packed
    # (4H, TB) slabs; no MXU pushes, no width-1 lane slices on the serial path. ----
    for t in range(T):
        x_t = x_ref[t]                                      # (I, TB)
        # Input projection recomputed per step (5 FMAs): independent of h/c, so it
        # pipelines freely, and there is no 8-deep live list to spill.
        gates = bias_b
        for i in range(I):
            gates = gates + wih_b[i] * x_t[i:i + 1, :]      # sublane-broadcast x row
        # Recurrent term: 2 FMAs on the packed slab.
        for k in range(H):
            gates = gates + whh_b[k] * h[k:k + 1, :]
        # PyTorch gate order: i, f, g, o.  One sigmoid push for the whole slab,
        # one tanh push for the g rows.
        sig = jax.nn.sigmoid(gates)
        i_g = sig[0:H, :]
        f_g = sig[H:2 * H, :]
        o_g = sig[3 * H:4 * H, :]
        g_g = jnp.tanh(gates[2 * H:3 * H, :])
        c = f_g * c + i_g * g_g
        h = o_g * jnp.tanh(c)

    # ---- Head: ReLU -> fc_1 -> ReLU -> fc (hn.view(-1, H) == (TB, H) for 1 layer). ----
    h_relu = jnp.maximum(h, 0.0)                            # (H, TB)

    # fc_1: contraction depth H=2 -> VPU broadcast FMAs, result already (128, TB).
    w1 = w1_ref[...]                                        # (128, H)
    acc = jnp.broadcast_to(b1_ref[...], (F, TB))
    for k in range(H):
        acc = acc + w1[:, k:k + 1] * h_relu[k:k + 1, :]
    fc1 = jnp.maximum(acc, 0.0)                             # (128, TB)

    # fc: single full-K (K=128) contraction producing the lane-dense (1, TB) row.
    out_row = jnp.dot(w2_ref[...], fc1,
                      preferred_element_type=jnp.float32) + b2_ref[...]     # (1, TB)
    out_ref[...] = out_row.astype(out_ref.dtype)


def _pick_batch_tile(B):
    """Lane-axis batch tile.  Multiples of 128 when tiling; >=2 grid steps for
    B >= 256 so the 'parallel' grid axis can shard across v7x's two TensorCores;
    otherwise a single full block (works for any B, including the B=2 demo)."""
    if B % 128 != 0:
        return B
    for tile in (1024, 512, 256, 128):
        if tile <= B // 2 and B % tile == 0:
            return tile
    return B


def lstm1_forward(x, params, batch_tile=None):
    """Glue: lays out params for the kernel, sets up the batch grid, calls pallas_call."""
    B, T, I = x.shape
    H = HIDDEN_SIZE

    if batch_tile is None:
        batch_tile = _pick_batch_tile(B)
    if batch_tile != B:
        # When actually tiling the batch, the lane-axis block must be 128-aligned.
        assert B % batch_tile == 0 and batch_tile % 128 == 0
    nb = B // batch_tile

    # Batch-on-lanes layout: (T, I, B) so the 128-wide lane axis carries batch.
    x_tib = jnp.transpose(x, (1, 2, 0)).astype(jnp.float32)       # (T, I, B)

    w_ih = params["w_ih"].astype(jnp.float32)                     # (4H, I)
    w_hh = params["w_hh"].astype(jnp.float32)                     # (4H, H)
    b = (params["b_ih"] + params["b_hh"]).reshape(4 * H, 1).astype(jnp.float32)
    w1 = params["w_fc1"].astype(jnp.float32)                      # (128, H)
    b1 = params["b_fc1"].reshape(FC1_OUT, 1).astype(jnp.float32)  # (128, 1)
    w2 = params["w_fc"].reshape(1, FC1_OUT).astype(jnp.float32)   # (1, 128)
    b2 = params["b_fc"].reshape(1, 1).astype(jnp.float32)         # (1, 1)

    def full2d(shape):
        return pl.BlockSpec(shape, lambda bidx: (0, 0))

    out = pl.pallas_call(
        lstm1_kernel,
        out_shape=jax.ShapeDtypeStruct((1, B), jnp.float32),
        grid_spec=pltpu.PrefetchScalarGridSpec(
            num_scalar_prefetch=0,
            grid=(nb,),
            in_specs=[
                pl.BlockSpec((T, I, batch_tile), lambda bidx: (0, 0, bidx)),  # x tile
                full2d((4 * H, I)),
                full2d((4 * H, H)),
                full2d((4 * H, 1)),
                full2d((FC1_OUT, H)),
                full2d((FC1_OUT, 1)),
                full2d((1, FC1_OUT)),
                full2d((1, 1)),
            ],
            out_specs=pl.BlockSpec((1, batch_tile), lambda bidx: (0, bidx)),
        ),
        compiler_params=pltpu.CompilerParams(
            dimension_semantics=("parallel",)),
    )(x_tib, w_ih, w_hh, b, w1, b1, w2, b2)

    return out.T   # (B, 1): matches the PyTorch module's output shape


def init_params(key):
    """Deterministic synthetic parameters with the same shapes as the PyTorch module."""
    ks = jax.random.split(key, 8)
    H, I = HIDDEN_SIZE, INPUT_SIZE
    scale = 0.1
    return {
        "w_ih":  scale * jax.random.normal(ks[0], (4 * H, I), jnp.float32),
        "w_hh":  scale * jax.random.normal(ks[1], (4 * H, H), jnp.float32),
        "b_ih":  scale * jax.random.normal(ks[2], (4 * H,), jnp.float32),
        "b_hh":  scale * jax.random.normal(ks[3], (4 * H,), jnp.float32),
        "w_fc1": scale * jax.random.normal(ks[4], (FC1_OUT, H), jnp.float32),
        "b_fc1": scale * jax.random.normal(ks[5], (FC1_OUT,), jnp.float32),
        "w_fc":  scale * jax.random.normal(ks[6], (NUM_CLASSES, FC1_OUT), jnp.float32),
        "b_fc":  scale * jax.random.normal(ks[7], (NUM_CLASSES,), jnp.float32),
    }


def reference_forward(x, p):
    """Pure-JAX reference mirroring PyTorch semantics, used for a sanity check."""
    B, T, _ = x.shape
    H = HIDDEN_SIZE
    h = jnp.zeros((B, H), jnp.float32)
    c = jnp.zeros((B, H), jnp.float32)
    for t in range(T):
        gates = x[:, t, :] @ p["w_ih"].T + p["b_ih"] + h @ p["w_hh"].T + p["b_hh"]
        i = jax.nn.sigmoid(gates[:, 0 * H:1 * H])
        f = jax.nn.sigmoid(gates[:, 1 * H:2 * H])
        g = jnp.tanh(gates[:, 2 * H:3 * H])
        o = jax.nn.sigmoid(gates[:, 3 * H:4 * H])
        c = f * c + i * g
        h = o * jnp.tanh(c)
    out = jnp.maximum(h, 0.0)
    out = jnp.maximum(out @ p["w_fc1"].T + p["b_fc1"], 0.0)
    return out @ p["w_fc"].T + p["b_fc"]


if __name__ == "__main__":
    key = jax.random.PRNGKey(0)
    k_x, k_p = jax.random.split(key)

    batch, seq_len = 2, 8
    x = jax.random.normal(k_x, (batch, seq_len, INPUT_SIZE), jnp.float32)
    params = init_params(k_p)

    out = lstm1_forward(x, params)
    out = jax.block_until_ready(out)

    ref = reference_forward(x, params)
    assert out.shape == (batch, NUM_CLASSES), out.shape
    assert jnp.allclose(out, ref, atol=1e-5, rtol=1e-5), (out, ref)

    print("KERNEL_OK")
</pallas_src>

<mosaic_0001>
module attributes {stable_mosaic.version = 11 : i64} {
  func.func @lstm1_kernel(%arg0: i32, %arg1: memref<8x5x2xf32, #tpu.memory_space<vmem>>, %arg2: memref<8x5xf32, #tpu.memory_space<vmem>>, %arg3: memref<8x2xf32, #tpu.memory_space<vmem>>, %arg4: memref<8x1xf32, #tpu.memory_space<vmem>>, %arg5: memref<128x2xf32, #tpu.memory_space<vmem>>, %arg6: memref<128x1xf32, #tpu.memory_space<vmem>>, %arg7: memref<1x128xf32, #tpu.memory_space<vmem>>, %arg8: memref<1x1xf32, #tpu.memory_space<vmem>>, %arg9: memref<1x2xf32, #tpu.memory_space<vmem>>) attributes {dimension_semantics = [#tpu.dimension_semantics<parallel>], iteration_bounds = array<i64: 1>, scalar_prefetch = 0 : i64, scratch_operands = 0 : i64, tpu.core_type = #tpu.core_type<tc>, window_params = [{transform_indices = @transform_0, window_bounds = array<i64: 8, 5, 2>}, {pipeline_mode = #tpu.pipeline_mode<synchronous>, transform_indices = @transform_1, window_bounds = array<i64: 8, 5>}, {pipeline_mode = #tpu.pipeline_mode<synchronous>, transform_indices = @transform_2, window_bounds = array<i64: 8, 2>}, {pipeline_mode = #tpu.pipeline_mode<synchronous>, transform_indices = @transform_3, window_bounds = array<i64: 8, 1>}, {pipeline_mode = #tpu.pipeline_mode<synchronous>, transform_indices = @transform_4, window_bounds = array<i64: 128, 2>}, {pipeline_mode = #tpu.pipeline_mode<synchronous>, transform_indices = @transform_5, window_bounds = array<i64: 128, 1>}, {pipeline_mode = #tpu.pipeline_mode<synchronous>, transform_indices = @transform_6, window_bounds = array<i64: 1, 128>}, {pipeline_mode = #tpu.pipeline_mode<synchronous>, transform_indices = @transform_7, window_bounds = array<i64: 1, 1>}, {transform_indices = @transform_8, window_bounds = array<i64: 1, 2>}]} {
    %c0 = arith.constant 0 : index
    %c0_0 = arith.constant 0 : index
    %0 = vector.load %arg2[%c0, %c0_0] : memref<8x5xf32, #tpu.memory_space<vmem>>, vector<8x5xf32>
    %c0_1 = arith.constant 0 : index
    %c0_2 = arith.constant 0 : index
    %1 = vector.load %arg3[%c0_1, %c0_2] : memref<8x2xf32, #tpu.memory_space<vmem>>, vector<8x2xf32>
    %2 = vector.extract_strided_slice %0 {offsets = [0, 0], sizes = [8, 1], strides = [1, 1]} : vector<8x5xf32> to vector<8x1xf32>
    %3 = vector.shape_cast %2 : vector<8x1xf32> to vector<8x1xf32>
    %4 = vector.broadcast %3 : vector<8x1xf32> to vector<8x2xf32>
    %5 = vector.extract_strided_slice %0 {offsets = [0, 1], sizes = [8, 1], strides = [1, 1]} : vector<8x5xf32> to vector<8x1xf32>
    %6 = vector.shape_cast %5 : vector<8x1xf32> to vector<8x1xf32>
    %7 = vector.broadcast %6 : vector<8x1xf32> to vector<8x2xf32>
    %8 = vector.extract_strided_slice %0 {offsets = [0, 2], sizes = [8, 1], strides = [1, 1]} : vector<8x5xf32> to vector<8x1xf32>
    %9 = vector.shape_cast %8 : vector<8x1xf32> to vector<8x1xf32>
    %10 = vector.broadcast %9 : vector<8x1xf32> to vector<8x2xf32>
    %11 = vector.extract_strided_slice %0 {offsets = [0, 3], sizes = [8, 1], strides = [1, 1]} : vector<8x5xf32> to vector<8x1xf32>
    %12 = vector.shape_cast %11 : vector<8x1xf32> to vector<8x1xf32>
    %13 = vector.broadcast %12 : vector<8x1xf32> to vector<8x2xf32>
    %14 = vector.extract_strided_slice %0 {offsets = [0, 4], sizes = [8, 1], strides = [1, 1]} : vector<8x5xf32> to vector<8x1xf32>
    %15 = vector.shape_cast %14 : vector<8x1xf32> to vector<8x1xf32>
    %16 = vector.broadcast %15 : vector<8x1xf32> to vector<8x2xf32>
    %17 = vector.extract_strided_slice %1 {offsets = [0, 0], sizes = [8, 1], strides = [1, 1]} : vector<8x2xf32> to vector<8x1xf32>
    %18 = vector.shape_cast %17 : vector<8x1xf32> to vector<8x1xf32>
    %19 = vector.broadcast %18 : vector<8x1xf32> to vector<8x2xf32>
    %20 = vector.extract_strided_slice %1 {offsets = [0, 1], sizes = [8, 1], strides = [1, 1]} : vector<8x2xf32> to vector<8x1xf32>
    %21 = vector.shape_cast %20 : vector<8x1xf32> to vector<8x1xf32>
    %22 = vector.broadcast %21 : vector<8x1xf32> to vector<8x2xf32>
    %c0_3 = arith.constant 0 : index
    %c0_4 = arith.constant 0 : index
    %23 = vector.load %arg4[%c0_3, %c0_4] : memref<8x1xf32, #tpu.memory_space<vmem>>, vector<8x1xf32>
    %24 = vector.shape_cast %23 : vector<8x1xf32> to vector<8x1xf32>
    %25 = vector.broadcast %24 : vector<8x1xf32> to vector<8x2xf32>
    %cst = arith.constant 0.000000e+00 : f32
    %26 = vector.broadcast %cst : f32 to vector<2x2xf32>
    %cst_5 = arith.constant 0.000000e+00 : f32
    %27 = vector.broadcast %cst_5 : f32 to vector<2x2xf32>
    %c0_6 = arith.constant 0 : index
    %c0_7 = arith.constant 0 : index
    %c0_8 = arith.constant 0 : index
    %28 = vector.load %arg1[%c0_6, %c0_7, %c0_8] : memref<8x5x2xf32, #tpu.memory_space<vmem>>, vector<1x5x2xf32>
    %29 = vector.shape_cast %28 : vector<1x5x2xf32> to vector<5x2xf32>
    %30 = vector.extract_strided_slice %29 {offsets = [0, 0], sizes = [1, 2], strides = [1, 1]} : vector<5x2xf32> to vector<1x2xf32>
    %31 = vector.broadcast %30 : vector<1x2xf32> to vector<8x2xf32>
    %32 = arith.mulf %4, %31 : vector<8x2xf32>
    %33 = arith.addf %25, %32 : vector<8x2xf32>
    %34 = vector.extract_strided_slice %29 {offsets = [1, 0], sizes = [1, 2], strides = [1, 1]} : vector<5x2xf32> to vector<1x2xf32>
    %35 = vector.broadcast %34 : vector<1x2xf32> to vector<8x2xf32>
    %36 = arith.mulf %7, %35 : vector<8x2xf32>
    %37 = arith.addf %33, %36 : vector<8x2xf32>
    %38 = vector.extract_strided_slice %29 {offsets = [2, 0], sizes = [1, 2], strides = [1, 1]} : vector<5x2xf32> to vector<1x2xf32>
    %39 = vector.broadcast %38 : vector<1x2xf32> to vector<8x2xf32>
    %40 = arith.mulf %10, %39 : vector<8x2xf32>
    %41 = arith.addf %37, %40 : vector<8x2xf32>
    %42 = vector.extract_strided_slice %29 {offsets = [3, 0], sizes = [1, 2], strides = [1, 1]} : vector<5x2xf32> to vector<1x2xf32>
    %43 = vector.broadcast %42 : vector<1x2xf32> to vector<8x2xf32>
    %44 = arith.mulf %13, %43 : vector<8x2xf32>
    %45 = arith.addf %41, %44 : vector<8x2xf32>
    %46 = vector.extract_strided_slice %29 {offsets = [4, 0], sizes = [1, 2], strides = [1, 1]} : vector<5x2xf32> to vector<1x2xf32>
    %47 = vector.broadcast %46 : vector<1x2xf32> to vector<8x2xf32>
    %48 = arith.mulf %16, %47 : vector<8x2xf32>
    %49 = arith.addf %45, %48 : vector<8x2xf32>
    %50 = vector.extract_strided_slice %26 {offsets = [0, 0], sizes = [1, 2], strides = [1, 1]} : vector<2x2xf32> to vector<1x2xf32>
    %51 = vector.broadcast %50 : vector<1x2xf32> to vector<8x2xf32>
    %52 = arith.mulf %19, %51 : vector<8x2xf32>
    %53 = arith.addf %49, %52 : vector<8x2xf32>
    %54 = vector.extract_strided_slice %26 {offsets = [1, 0], sizes = [1, 2], strides = [1, 1]} : vector<2x2xf32> to vector<1x2xf32>
    %55 = vector.broadcast %54 : vector<1x2xf32> to vector<8x2xf32>
    %56 = arith.mulf %22, %55 : vector<8x2xf32>
    %57 = arith.addf %53, %56 : vector<8x2xf32>
    %58 = arith.negf %57 : vector<8x2xf32>
    %59 = math.exp %58 : vector<8x2xf32>
    %cst_9 = arith.constant 1.000000e+00 : f32
    %60 = vector.broadcast %cst_9 : f32 to vector<8x2xf32>
    %61 = arith.addf %60, %59 : vector<8x2xf32>
    %62 = arith.divf %60, %61 : vector<8x2xf32>
    %63 = vector.extract_strided_slice %62 {offsets = [0, 0], sizes = [2, 2], strides = [1, 1]} : vector<8x2xf32> to vector<2x2xf32>
    %64 = vector.extract_strided_slice %62 {offsets = [2, 0], sizes = [2, 2], strides = [1, 1]} : vector<8x2xf32> to vector<2x2xf32>
    %65 = vector.extract_strided_slice %62 {offsets = [6, 0], sizes = [2, 2], strides = [1, 1]} : vector<8x2xf32> to vector<2x2xf32>
    %66 = vector.extract_strided_slice %57 {offsets = [4, 0], sizes = [2, 2], strides = [1, 1]} : vector<8x2xf32> to vector<2x2xf32>
    %67 = math.tanh %66 : vector<2x2xf32>
    %68 = arith.mulf %64, %27 : vector<2x2xf32>
    %69 = arith.mulf %63, %67 : vector<2x2xf32>
    %70 = arith.addf %68, %69 : vector<2x2xf32>
    %71 = math.tanh %70 : vector<2x2xf32>
    %72 = arith.mulf %65, %71 : vector<2x2xf32>
    %c1 = arith.constant 1 : index
    %c0_10 = arith.constant 0 : index
    %c0_11 = arith.constant 0 : index
    %73 = vector.load %arg1[%c1, %c0_10, %c0_11] : memref<8x5x2xf32, #tpu.memory_space<vmem>>, vector<1x5x2xf32>
    %74 = vector.shape_cast %73 : vector<1x5x2xf32> to vector<5x2xf32>
    %75 = vector.extract_strided_slice %74 {offsets = [0, 0], sizes = [1, 2], strides = [1, 1]} : vector<5x2xf32> to vector<1x2xf32>
    %76 = vector.broadcast %75 : vector<1x2xf32> to vector<8x2xf32>
    %77 = arith.mulf %4, %76 : vector<8x2xf32>
    %78 = arith.addf %25, %77 : vector<8x2xf32>
    %79 = vector.extract_strided_slice %74 {offsets = [1, 0], sizes = [1, 2], strides = [1, 1]} : vector<5x2xf32> to vector<1x2xf32>
    %80 = vector.broadcast %79 : vector<1x2xf32> to vector<8x2xf32>
    %81 = arith.mulf %7, %80 : vector<8x2xf32>
    %82 = arith.addf %78, %81 : vector<8x2xf32>
    %83 = vector.extract_strided_slice %74 {offsets = [2, 0], sizes = [1, 2], strides = [1, 1]} : vector<5x2xf32> to vector<1x2xf32>
    %84 = vector.broadcast %83 : vector<1x2xf32> to vector<8x2xf32>
    %85 = arith.mulf %10, %84 : vector<8x2xf32>
    %86 = arith.addf %82, %85 : vector<8x2xf32>
    %87 = vector.extract_strided_slice %74 {offsets = [3, 0], sizes = [1, 2], strides = [1, 1]} : vector<5x2xf32> to vector<1x2xf32>
    %88 = vector.broadcast %87 : vector<1x2xf32> to vector<8x2xf32>
    %89 = arith.mulf %13, %88 : vector<8x2xf32>
    %90 = arith.addf %86, %89 : vector<8x2xf32>
    %91 = vector.extract_strided_slice %74 {offsets = [4, 0], sizes = [1, 2], strides = [1, 1]} : vector<5x2xf32> to vector<1x2xf32>
    %92 = vector.broadcast %91 : vector<1x2xf32> to vector<8x2xf32>
    %93 = arith.mulf %16, %92 : vector<8x2xf32>
    %94 = arith.addf %90, %93 : vector<8x2xf32>
    %95 = vector.extract_strided_slice %72 {offsets = [0, 0], sizes = [1, 2], strides = [1, 1]} : vector<2x2xf32> to vector<1x2xf32>
    %96 = vector.broadcast %95 : vector<1x2xf32> to vector<8x2xf32>
    %97 = arith.mulf %19, %96 : vector<8x2xf32>
    %98 = arith.addf %94, %97 : vector<8x2xf32>
    %99 = vector.extract_strided_slice %72 {offsets = [1, 0], sizes = [1, 2], strides = [1, 1]} : vector<2x2xf32> to vector<1x2xf32>
    %100 = vector.broadcast %99 : vector<1x2xf32> to vector<8x2xf32>
    %101 = arith.mulf %22, %100 : vector<8x2xf32>
    %102 = arith.addf %98, %101 : vector<8x2xf32>
    %103 = arith.negf %102 : vector<8x2xf32>
    %104 = math.exp %103 : vector<8x2xf32>
    %cst_12 = arith.constant 1.000000e+00 : f32
    %105 = vector.broadcast %cst_12 : f32 to vector<8x2xf32>
    %106 = arith.addf %105, %104 : vector<8x2xf32>
    %107 = arith.divf %105, %106 : vector<8x2xf32>
    %108 = vector.extract_strided_slice %107 {offsets = [0, 0], sizes = [2, 2], strides = [1, 1]} : vector<8x2xf32> to vector<2x2xf32>
    %109 = vector.extract_strided_slice %107 {offsets = [2, 0], sizes = [2, 2], strides = [1, 1]} : vector<8x2xf32> to vector<2x2xf32>
    %110 = vector.extract_strided_slice %107 {offsets = [6, 0], sizes = [2, 2], strides = [1, 1]} : vector<8x2xf32> to vector<2x2xf32>
    %111 = vector.extract_strided_slice %102 {offsets = [4, 0], sizes = [2, 2], strides = [1, 1]} : vector<8x2xf32> to vector<2x2xf32>
    %112 = math.tanh %111 : vector<2x2xf32>
    %113 = arith.mulf %109, %70 : vector<2x2xf32>
    %114 = arith.mulf %108, %112 : vector<2x2xf32>
    %115 = arith.addf %113, %114 : vector<2x2xf32>
    %116 = math.tanh %115 : vector<2x2xf32>
    %117 = arith.mulf %110, %116 : vector<2x2xf32>
    %c2 = arith.constant 2 : index
    %c0_13 = arith.constant 0 : index
    %c0_14 = arith.constant 0 : index
    %118 = vector.load %arg1[%c2, %c0_13, %c0_14] : memref<8x5x2xf32, #tpu.memory_space<vmem>>, vector<1x5x2xf32>
    %119 = vector.shape_cast %118 : vector<1x5x2xf32> to vector<5x2xf32>
    %120 = vector.extract_strided_slice %119 {offsets = [0, 0], sizes = [1, 2], strides = [1, 1]} : vector<5x2xf32> to vector<1x2xf32>
    %121 = vector.broadcast %120 : vector<1x2xf32> to vector<8x2xf32>
    %122 = arith.mulf %4, %121 : vector<8x2xf32>
    %123 = arith.addf %25, %122 : vector<8x2xf32>
    %124 = vector.extract_strided_slice %119 {offsets = [1, 0], sizes = [1, 2], strides = [1, 1]} : vector<5x2xf32> to vector<1x2xf32>
    %125 = vector.broadcast %124 : vector<1x2xf32> to vector<8x2xf32>
    %126 = arith.mulf %7, %125 : vector<8x2xf32>
    %127 = arith.addf %123, %126 : vector<8x2xf32>
    %128 = vector.extract_strided_slice %119 {offsets = [2, 0], sizes = [1, 2], strides = [1, 1]} : vector<5x2xf32> to vector<1x2xf32>
    %129 = vector.broadcast %128 : vector<1x2xf32> to vector<8x2xf32>
    %130 = arith.mulf %10, %129 : vector<8x2xf32>
    %131 = arith.addf %127, %130 : vector<8x2xf32>
    %132 = vector.extract_strided_slice %119 {offsets = [3, 0], sizes = [1, 2], strides = [1, 1]} : vector<5x2xf32> to vector<1x2xf32>
    %133 = vector.broadcast %132 : vector<1x2xf32> to vector<8x2xf32>
    %134 = arith.mulf %13, %133 : vector<8x2xf32>
    %135 = arith.addf %131, %134 : vector<8x2xf32>
    %136 = vector.extract_strided_slice %119 {offsets = [4, 0], sizes = [1, 2], strides = [1, 1]} : vector<5x2xf32> to vector<1x2xf32>
    %137 = vector.broadcast %136 : vector<1x2xf32> to vector<8x2xf32>
    %138 = arith.mulf %16, %137 : vector<8x2xf32>
    %139 = arith.addf %135, %138 : vector<8x2xf32>
    %140 = vector.extract_strided_slice %117 {offsets = [0, 0], sizes = [1, 2], strides = [1, 1]} : vector<2x2xf32> to vector<1x2xf32>
    %141 = vector.broadcast %140 : vector<1x2xf32> to vector<8x2xf32>
    %142 = arith.mulf %19, %141 : vector<8x2xf32>
    %143 = arith.addf %139, %142 : vector<8x2xf32>
    %144 = vector.extract_strided_slice %117 {offsets = [1, 0], sizes = [1, 2], strides = [1, 1]} : vector<2x2xf32> to vector<1x2xf32>
    %145 = vector.broadcast %144 : vector<1x2xf32> to vector<8x2xf32>
    %146 = arith.mulf %22, %145 : vector<8x2xf32>
    %147 = arith.addf %143, %146 : vector<8x2xf32>
    %148 = arith.negf %147 : vector<8x2xf32>
    %149 = math.exp %148 : vector<8x2xf32>
    %cst_15 = arith.constant 1.000000e+00 : f32
    %150 = vector.broadcast %cst_15 : f32 to vector<8x2xf32>
    %151 = arith.addf %150, %149 : vector<8x2xf32>
    %152 = arith.divf %150, %151 : vector<8x2xf32>
    %153 = vector.extract_strided_slice %152 {offsets = [0, 0], sizes = [2, 2], strides = [1, 1]} : vector<8x2xf32> to vector<2x2xf32>
    %154 = vector.extract_strided_slice %152 {offsets = [2, 0], sizes = [2, 2], strides = [1, 1]} : vector<8x2xf32> to vector<2x2xf32>
    %155 = vector.extract_strided_slice %152 {offsets = [6, 0], sizes = [2, 2], strides = [1, 1]} : vector<8x2xf32> to vector<2x2xf32>
    %156 = vector.extract_strided_slice %147 {offsets = [4, 0], sizes = [2, 2], strides = [1, 1]} : vector<8x2xf32> to vector<2x2xf32>
    %157 = math.tanh %156 : vector<2x2xf32>
    %158 = arith.mulf %154, %115 : vector<2x2xf32>
    %159 = arith.mulf %153, %157 : vector<2x2xf32>
    %160 = arith.addf %158, %159 : vector<2x2xf32>
    %161 = math.tanh %160 : vector<2x2xf32>
    %162 = arith.mulf %155, %161 : vector<2x2xf32>
    %c3 = arith.constant 3 : index
    %c0_16 = arith.constant 0 : index
    %c0_17 = arith.constant 0 : index
    %163 = vector.load %arg1[%c3, %c0_16, %c0_17] : memref<8x5x2xf32, #tpu.memory_space<vmem>>, vector<1x5x2xf32>
    %164 = vector.shape_cast %163 : vector<1x5x2xf32> to vector<5x2xf32>
    %165 = vector.extract_strided_slice %164 {offsets = [0, 0], sizes = [1, 2], strides = [1, 1]} : vector<5x2xf32> to vector<1x2xf32>
    %166 = vector.broadcast %165 : vector<1x2xf32> to vector<8x2xf32>
    %167 = arith.mulf %4, %166 : vector<8x2xf32>
    %168 = arith.addf %25, %167 : vector<8x2xf32>
    %169 = vector.extract_strided_slice %164 {offsets = [1, 0], sizes = [1, 2], strides = [1, 1]} : vector<5x2xf32> to vector<1x2xf32>
    %170 = vector.broadcast %169 : vector<1x2xf32> to vector<8x2xf32>
    %171 = arith.mulf %7, %170 : vector<8x2xf32>
    %172 = arith.addf %168, %171 : vector<8x2xf32>
    %173 = vector.extract_strided_slice %164 {offsets = [2, 0], sizes = [1, 2], strides = [1, 1]} : vector<5x2xf32> to vector<1x2xf32>
    %174 = vector.broadcast %173 : vector<1x2xf32> to vector<8x2xf32>
    %175 = arith.mulf %10, %174 : vector<8x2xf32>
    %176 = arith.addf %172, %175 : vector<8x2xf32>
    %177 = vector.extract_strided_slice %164 {offsets = [3, 0], sizes = [1, 2], strides = [1, 1]} : vector<5x2xf32> to vector<1x2xf32>
    %178 = vector.broadcast %177 : vector<1x2xf32> to vector<8x2xf32>
    %179 = arith.mulf %13, %178 : vector<8x2xf32>
    %180 = arith.addf %176, %179 : vector<8x2xf32>
    %181 = vector.extract_strided_slice %164 {offsets = [4, 0], sizes = [1, 2], strides = [1, 1]} : vector<5x2xf32> to vector<1x2xf32>
    %182 = vector.broadcast %181 : vector<1x2xf32> to vector<8x2xf32>
    %183 = arith.mulf %16, %182 : vector<8x2xf32>
    %184 = arith.addf %180, %183 : vector<8x2xf32>
    %185 = vector.extract_strided_slice %162 {offsets = [0, 0], sizes = [1, 2], strides = [1, 1]} : vector<2x2xf32> to vector<1x2xf32>
    %186 = vector.broadcast %185 : vector<1x2xf32> to vector<8x2xf32>
    %187 = arith.mulf %19, %186 : vector<8x2xf32>
    %188 = arith.addf %184, %187 : vector<8x2xf32>
    %189 = vector.extract_strided_slice %162 {offsets = [1, 0], sizes = [1, 2], strides = [1, 1]} : vector<2x2xf32> to vector<1x2xf32>
    %190 = vector.broadcast %189 : vector<1x2xf32> to vector<8x2xf32>
    %191 = arith.mulf %22, %190 : vector<8x2xf32>
    %192 = arith.addf %188, %191 : vector<8x2xf32>
    %193 = arith.negf %192 : vector<8x2xf32>
    %194 = math.exp %193 : vector<8x2xf32>
    %cst_18 = arith.constant 1.000000e+00 : f32
    %195 = vector.broadcast %cst_18 : f32 to vector<8x2xf32>
    %196 = arith.addf %195, %194 : vector<8x2xf32>
    %197 = arith.divf %195, %196 : vector<8x2xf32>
    %198 = vector.extract_strided_slice %197 {offsets = [0, 0], sizes = [2, 2], strides = [1, 1]} : vector<8x2xf32> to vector<2x2xf32>
    %199 = vector.extract_strided_slice %197 {offsets = [2, 0], sizes = [2, 2], strides = [1, 1]} : vector<8x2xf32> to vector<2x2xf32>
    %200 = vector.extract_strided_slice %197 {offsets = [6, 0], sizes = [2, 2], strides = [1, 1]} : vector<8x2xf32> to vector<2x2xf32>
    %201 = vector.extract_strided_slice %192 {offsets = [4, 0], sizes = [2, 2], strides = [1, 1]} : vector<8x2xf32> to vector<2x2xf32>
    %202 = math.tanh %201 : vector<2x2xf32>
    %203 = arith.mulf %199, %160 : vector<2x2xf32>
    %204 = arith.mulf %198, %202 : vector<2x2xf32>
    %205 = arith.addf %203, %204 : vector<2x2xf32>
    %206 = math.tanh %205 : vector<2x2xf32>
    %207 = arith.mulf %200, %206 : vector<2x2xf32>
    %c4 = arith.constant 4 : index
    %c0_19 = arith.constant 0 : index
    %c0_20 = arith.constant 0 : index
    %208 = vector.load %arg1[%c4, %c0_19, %c0_20] : memref<8x5x2xf32, #tpu.memory_space<vmem>>, vector<1x5x2xf32>
    %209 = vector.shape_cast %208 : vector<1x5x2xf32> to vector<5x2xf32>
    %210 = vector.extract_strided_slice %209 {offsets = [0, 0], sizes = [1, 2], strides = [1, 1]} : vector<5x2xf32> to vector<1x2xf32>
    %211 = vector.broadcast %210 : vector<1x2xf32> to vector<8x2xf32>
    %212 = arith.mulf %4, %211 : vector<8x2xf32>
    %213 = arith.addf %25, %212 : vector<8x2xf32>
    %214 = vector.extract_strided_slice %209 {offsets = [1, 0], sizes = [1, 2], strides = [1, 1]} : vector<5x2xf32> to vector<1x2xf32>
    %215 = vector.broadcast %214 : vector<1x2xf32> to vector<8x2xf32>
    %216 = arith.mulf %7, %215 : vector<8x2xf32>
    %217 = arith.addf %213, %216 : vector<8x2xf32>
    %218 = vector.extract_strided_slice %209 {offsets = [2, 0], sizes = [1, 2], strides = [1, 1]} : vector<5x2xf32> to vector<1x2xf32>
    %219 = vector.broadcast %218 : vector<1x2xf32> to vector<8x2xf32>
    %220 = arith.mulf %10, %219 : vector<8x2xf32>
    %221 = arith.addf %217, %220 : vector<8x2xf32>
    %222 = vector.extract_strided_slice %209 {offsets = [3, 0], sizes = [1, 2], strides = [1, 1]} : vector<5x2xf32> to vector<1x2xf32>
    %223 = vector.broadcast %222 : vector<1x2xf32> to vector<8x2xf32>
    %224 = arith.mulf %13, %223 : vector<8x2xf32>
    %225 = arith.addf %221, %224 : vector<8x2xf32>
    %226 = vector.extract_strided_slice %209 {offsets = [4, 0], sizes = [1, 2], strides = [1, 1]} : vector<5x2xf32> to vector<1x2xf32>
    %227 = vector.broadcast %226 : vector<1x2xf32> to vector<8x2xf32>
    %228 = arith.mulf %16, %227 : vector<8x2xf32>
    %229 = arith.addf %225, %228 : vector<8x2xf32>
    %230 = vector.extract_strided_slice %207 {offsets = [0, 0], sizes = [1, 2], strides = [1, 1]} : vector<2x2xf32> to vector<1x2xf32>
    %231 = vector.broadcast %230 : vector<1x2xf32> to vector<8x2xf32>
    %232 = arith.mulf %19, %231 : vector<8x2xf32>
    %233 = arith.addf %229, %232 : vector<8x2xf32>
    %234 = vector.extract_strided_slice %207 {offsets = [1, 0], sizes = [1, 2], strides = [1, 1]} : vector<2x2xf32> to vector<1x2xf32>
    %235 = vector.broadcast %234 : vector<1x2xf32> to vector<8x2xf32>
    %236 = arith.mulf %22, %235 : vector<8x2xf32>
    %237 = arith.addf %233, %236 : vector<8x2xf32>
    %238 = arith.negf %237 : vector<8x2xf32>
    %239 = math.exp %238 : vector<8x2xf32>
    %cst_21 = arith.constant 1.000000e+00 : f32
    %240 = vector.broadcast %cst_21 : f32 to vector<8x2xf32>
    %241 = arith.addf %240, %239 : vector<8x2xf32>
    %242 = arith.divf %240, %241 : vector<8x2xf32>
    %243 = vector.extract_strided_slice %242 {offsets = [0, 0], sizes = [2, 2], strides = [1, 1]} : vector<8x2xf32> to vector<2x2xf32>
    %244 = vector.extract_strided_slice %242 {offsets = [2, 0], sizes = [2, 2], strides = [1, 1]} : vector<8x2xf32> to vector<2x2xf32>
    %245 = vector.extract_strided_slice %242 {offsets = [6, 0], sizes = [2, 2], strides = [1, 1]} : vector<8x2xf32> to vector<2x2xf32>
    %246 = vector.extract_strided_slice %237 {offsets = [4, 0], sizes = [2, 2], strides = [1, 1]} : vector<8x2xf32> to vector<2x2xf32>
    %247 = math.tanh %246 : vector<2x2xf32>
    %248 = arith.mulf %244, %205 : vector<2x2xf32>
    %249 = arith.mulf %243, %247 : vector<2x2xf32>
    %250 = arith.addf %248, %249 : vector<2x2xf32>
    %251 = math.tanh %250 : vector<2x2xf32>
    %252 = arith.mulf %245, %251 : vector<2x2xf32>
    %c5 = arith.constant 5 : index
    %c0_22 = arith.constant 0 : index
    %c0_23 = arith.constant 0 : index
    %253 = vector.load %arg1[%c5, %c0_22, %c0_23] : memref<8x5x2xf32, #tpu.memory_space<vmem>>, vector<1x5x2xf32>
    %254 = vector.shape_cast %253 : vector<1x5x2xf32> to vector<5x2xf32>
    %255 = vector.extract_strided_slice %254 {offsets = [0, 0], sizes = [1, 2], strides = [1, 1]} : vector<5x2xf32> to vector<1x2xf32>
    %256 = vector.broadcast %255 : vector<1x2xf32> to vector<8x2xf32>
    %257 = arith.mulf %4, %256 : vector<8x2xf32>
    %258 = arith.addf %25, %257 : vector<8x2xf32>
    %259 = vector.extract_strided_slice %254 {offsets = [1, 0], sizes = [1, 2], strides = [1, 1]} : vector<5x2xf32> to vector<1x2xf32>
    %260 = vector.broadcast %259 : vector<1x2xf32> to vector<8x2xf32>
    %261 = arith.mulf %7, %260 : vector<8x2xf32>
    %262 = arith.addf %258, %261 : vector<8x2xf32>
    %263 = vector.extract_strided_slice %254 {offsets = [2, 0], sizes = [1, 2], strides = [1, 1]} : vector<5x2xf32> to vector<1x2xf32>
    %264 = vector.broadcast %263 : vector<1x2xf32> to vector<8x2xf32>
    %265 = arith.mulf %10, %264 : vector<8x2xf32>
    %266 = arith.addf %262, %265 : vector<8x2xf32>
    %267 = vector.extract_strided_slice %254 {offsets = [3, 0], sizes = [1, 2], strides = [1, 1]} : vector<5x2xf32> to vector<1x2xf32>
    %268 = vector.broadcast %267 : vector<1x2xf32> to vector<8x2xf32>
    %269 = arith.mulf %13, %268 : vector<8x2xf32>
    %270 = arith.addf %266, %269 : vector<8x2xf32>
    %271 = vector.extract_strided_slice %254 {offsets = [4, 0], sizes = [1, 2], strides = [1, 1]} : vector<5x2xf32> to vector<1x2xf32>
    %272 = vector.broadcast %271 : vector<1x2xf32> to vector<8x2xf32>
    %273 = arith.mulf %16, %272 : vector<8x2xf32>
    %274 = arith.addf %270, %273 : vector<8x2xf32>
    %275 = vector.extract_strided_slice %252 {offsets = [0, 0], sizes = [1, 2], strides = [1, 1]} : vector<2x2xf32> to vector<1x2xf32>
    %276 = vector.broadcast %275 : vector<1x2xf32> to vector<8x2xf32>
    %277 = arith.mulf %19, %276 : vector<8x2xf32>
    %278 = arith.addf %274, %277 : vector<8x2xf32>
    %279 = vector.extract_strided_slice %252 {offsets = [1, 0], sizes = [1, 2], strides = [1, 1]} : vector<2x2xf32> to vector<1x2xf32>
    %280 = vector.broadcast %279 : vector<1x2xf32> to vector<8x2xf32>
    %281 = arith.mulf %22, %280 : vector<8x2xf32>
    %282 = arith.addf %278, %281 : vector<8x2xf32>
    %283 = arith.negf %282 : vector<8x2xf32>
    %284 = math.exp %283 : vector<8x2xf32>
    %cst_24 = arith.constant 1.000000e+00 : f32
    %285 = vector.broadcast %cst_24 : f32 to vector<8x2xf32>
    %286 = arith.addf %285, %284 : vector<8x2xf32>
    %287 = arith.divf %285, %286 : vector<8x2xf32>
    %288 = vector.extract_strided_slice %287 {offsets = [0, 0], sizes = [2, 2], strides = [1, 1]} : vector<8x2xf32> to vector<2x2xf32>
    %289 = vector.extract_strided_slice %287 {offsets = [2, 0], sizes = [2, 2], strides = [1, 1]} : vector<8x2xf32> to vector<2x2xf32>
    %290 = vector.extract_strided_slice %287 {offsets = [6, 0], sizes = [2, 2], strides = [1, 1]} : vector<8x2xf32> to vector<2x2xf32>
    %291 = vector.extract_strided_slice %282 {offsets = [4, 0], sizes = [2, 2], strides = [1, 1]} : vector<8x2xf32> to vector<2x2xf32>
    %292 = math.tanh %291 : vector<2x2xf32>
    %293 = arith.mulf %289, %250 : vector<2x2xf32>
    %294 = arith.mulf %288, %292 : vector<2x2xf32>
    %295 = arith.addf %293, %294 : vector<2x2xf32>
    %296 = math.tanh %295 : vector<2x2xf32>
    %297 = arith.mulf %290, %296 : vector<2x2xf32>
    %c6 = arith.constant 6 : index
    %c0_25 = arith.constant 0 : index
    %c0_26 = arith.constant 0 : index
    %298 = vector.load %arg1[%c6, %c0_25, %c0_26] : memref<8x5x2xf32, #tpu.memory_space<vmem>>, vector<1x5x2xf32>
    %299 = vector.shape_cast %298 : vector<1x5x2xf32> to vector<5x2xf32>
    %300 = vector.extract_strided_slice %299 {offsets = [0, 0], sizes = [1, 2], strides = [1, 1]} : vector<5x2xf32> to vector<1x2xf32>
    %301 = vector.broadcast %300 : vector<1x2xf32> to vector<8x2xf32>
    %302 = arith.mulf %4, %301 : vector<8x2xf32>
    %303 = arith.addf %25, %302 : vector<8x2xf32>
    %304 = vector.extract_strided_slice %299 {offsets = [1, 0], sizes = [1, 2], strides = [1, 1]} : vector<5x2xf32> to vector<1x2xf32>
    %305 = vector.broadcast %304 : vector<1x2xf32> to vector<8x2xf32>
    %306 = arith.mulf %7, %305 : vector<8x2xf32>
    %307 = arith.addf %303, %306 : vector<8x2xf32>
    %308 = vector.extract_strided_slice %299 {offsets = [2, 0], sizes = [1, 2], strides = [1, 1]} : vector<5x2xf32> to vector<1x2xf32>
    %309 = vector.broadcast %308 : vector<1x2xf32> to vector<8x2xf32>
    %310 = arith.mulf %10, %309 : vector<8x2xf32>
    %311 = arith.addf %307, %310 : vector<8x2xf32>
    %312 = vector.extract_strided_slice %299 {offsets = [3, 0], sizes = [1, 2], strides = [1, 1]} : vector<5x2xf32> to vector<1x2xf32>
    %313 = vector.broadcast %312 : vector<1x2xf32> to vector<8x2xf32>
    %314 = arith.mulf %13, %313 : vector<8x2xf32>
    %315 = arith.addf %311, %314 : vector<8x2xf32>
    %316 = vector.extract_strided_slice %299 {offsets = [4, 0], sizes = [1, 2], strides = [1, 1]} : vector<5x2xf32> to vector<1x2xf32>
    %317 = vector.broadcast %316 : vector<1x2xf32> to vector<8x2xf32>
    %318 = arith.mulf %16, %317 : vector<8x2xf32>
    %319 = arith.addf %315, %318 : vector<8x2xf32>
    %320 = vector.extract_strided_slice %297 {offsets = [0, 0], sizes = [1, 2], strides = [1, 1]} : vector<2x2xf32> to vector<1x2xf32>
    %321 = vector.broadcast %320 : vector<1x2xf32> to vector<8x2xf32>
    %322 = arith.mulf %19, %321 : vector<8x2xf32>
    %323 = arith.addf %319, %322 : vector<8x2xf32>
    %324 = vector.extract_strided_slice %297 {offsets = [1, 0], sizes = [1, 2], strides = [1, 1]} : vector<2x2xf32> to vector<1x2xf32>
    %325 = vector.broadcast %324 : vector<1x2xf32> to vector<8x2xf32>
    %326 = arith.mulf %22, %325 : vector<8x2xf32>
    %327 = arith.addf %323, %326 : vector<8x2xf32>
    %328 = arith.negf %327 : vector<8x2xf32>
    %329 = math.exp %328 : vector<8x2xf32>
    %cst_27 = arith.constant 1.000000e+00 : f32
    %330 = vector.broadcast %cst_27 : f32 to vector<8x2xf32>
    %331 = arith.addf %330, %329 : vector<8x2xf32>
    %332 = arith.divf %330, %331 : vector<8x2xf32>
    %333 = vector.extract_strided_slice %332 {offsets = [0, 0], sizes = [2, 2], strides = [1, 1]} : vector<8x2xf32> to vector<2x2xf32>
    %334 = vector.extract_strided_slice %332 {offsets = [2, 0], sizes = [2, 2], strides = [1, 1]} : vector<8x2xf32> to vector<2x2xf32>
    %335 = vector.extract_strided_slice %332 {offsets = [6, 0], sizes = [2, 2], strides = [1, 1]} : vector<8x2xf32> to vector<2x2xf32>
    %336 = vector.extract_strided_slice %327 {offsets = [4, 0], sizes = [2, 2], strides = [1, 1]} : vector<8x2xf32> to vector<2x2xf32>
    %337 = math.tanh %336 : vector<2x2xf32>
    %338 = arith.mulf %334, %295 : vector<2x2xf32>
    %339 = arith.mulf %333, %337 : vector<2x2xf32>
    %340 = arith.addf %338, %339 : vector<2x2xf32>
    %341 = math.tanh %340 : vector<2x2xf32>
    %342 = arith.mulf %335, %341 : vector<2x2xf32>
    %c7 = arith.constant 7 : index
    %c0_28 = arith.constant 0 : index
    %c0_29 = arith.constant 0 : index
    %343 = vector.load %arg1[%c7, %c0_28, %c0_29] : memref<8x5x2xf32, #tpu.memory_space<vmem>>, vector<1x5x2xf32>
    %344 = vector.shape_cast %343 : vector<1x5x2xf32> to vector<5x2xf32>
    %345 = vector.extract_strided_slice %344 {offsets = [0, 0], sizes = [1, 2], strides = [1, 1]} : vector<5x2xf32> to vector<1x2xf32>
    %346 = vector.broadcast %345 : vector<1x2xf32> to vector<8x2xf32>
    %347 = arith.mulf %4, %346 : vector<8x2xf32>
    %348 = arith.addf %25, %347 : vector<8x2xf32>
    %349 = vector.extract_strided_slice %344 {offsets = [1, 0], sizes = [1, 2], strides = [1, 1]} : vector<5x2xf32> to vector<1x2xf32>
    %350 = vector.broadcast %349 : vector<1x2xf32> to vector<8x2xf32>
    %351 = arith.mulf %7, %350 : vector<8x2xf32>
    %352 = arith.addf %348, %351 : vector<8x2xf32>
    %353 = vector.extract_strided_slice %344 {offsets = [2, 0], sizes = [1, 2], strides = [1, 1]} : vector<5x2xf32> to vector<1x2xf32>
    %354 = vector.broadcast %353 : vector<1x2xf32> to vector<8x2xf32>
    %355 = arith.mulf %10, %354 : vector<8x2xf32>
    %356 = arith.addf %352, %355 : vector<8x2xf32>
    %357 = vector.extract_strided_slice %344 {offsets = [3, 0], sizes = [1, 2], strides = [1, 1]} : vector<5x2xf32> to vector<1x2xf32>
    %358 = vector.broadcast %357 : vector<1x2xf32> to vector<8x2xf32>
    %359 = arith.mulf %13, %358 : vector<8x2xf32>
    %360 = arith.addf %356, %359 : vector<8x2xf32>
    %361 = vector.extract_strided_slice %344 {offsets = [4, 0], sizes = [1, 2], strides = [1, 1]} : vector<5x2xf32> to vector<1x2xf32>
    %362 = vector.broadcast %361 : vector<1x2xf32> to vector<8x2xf32>
    %363 = arith.mulf %16, %362 : vector<8x2xf32>
    %364 = arith.addf %360, %363 : vector<8x2xf32>
    %365 = vector.extract_strided_slice %342 {offsets = [0, 0], sizes = [1, 2], strides = [1, 1]} : vector<2x2xf32> to vector<1x2xf32>
    %366 = vector.broadcast %365 : vector<1x2xf32> to vector<8x2xf32>
    %367 = arith.mulf %19, %366 : vector<8x2xf32>
    %368 = arith.addf %364, %367 : vector<8x2xf32>
    %369 = vector.extract_strided_slice %342 {offsets = [1, 0], sizes = [1, 2], strides = [1, 1]} : vector<2x2xf32> to vector<1x2xf32>
    %370 = vector.broadcast %369 : vector<1x2xf32> to vector<8x2xf32>
    %371 = arith.mulf %22, %370 : vector<8x2xf32>
    %372 = arith.addf %368, %371 : vector<8x2xf32>
    %373 = arith.negf %372 : vector<8x2xf32>
    %374 = math.exp %373 : vector<8x2xf32>
    %cst_30 = arith.constant 1.000000e+00 : f32
    %375 = vector.broadcast %cst_30 : f32 to vector<8x2xf32>
    %376 = arith.addf %375, %374 : vector<8x2xf32>
    %377 = arith.divf %375, %376 : vector<8x2xf32>
    %378 = vector.extract_strided_slice %377 {offsets = [0, 0], sizes = [2, 2], strides = [1, 1]} : vector<8x2xf32> to vector<2x2xf32>
    %379 = vector.extract_strided_slice %377 {offsets = [2, 0], sizes = [2, 2], strides = [1, 1]} : vector<8x2xf32> to vector<2x2xf32>
    %380 = vector.extract_strided_slice %377 {offsets = [6, 0], sizes = [2, 2], strides = [1, 1]} : vector<8x2xf32> to vector<2x2xf32>
    %381 = vector.extract_strided_slice %372 {offsets = [4, 0], sizes = [2, 2], strides = [1, 1]} : vector<8x2xf32> to vector<2x2xf32>
    %382 = math.tanh %381 : vector<2x2xf32>
    %383 = arith.mulf %379, %340 : vector<2x2xf32>
    %384 = arith.mulf %378, %382 : vector<2x2xf32>
    %385 = arith.addf %383, %384 : vector<2x2xf32>
    %386 = math.tanh %385 : vector<2x2xf32>
    %387 = arith.mulf %380, %386 : vector<2x2xf32>
    %cst_31 = arith.constant 0.000000e+00 : f32
    %388 = vector.broadcast %cst_31 : f32 to vector<2x2xf32>
    %389 = arith.maximumf %387, %388 : vector<2x2xf32>
    %c0_32 = arith.constant 0 : index
    %c0_33 = arith.constant 0 : index
    %390 = vector.load %arg5[%c0_32, %c0_33] : memref<128x2xf32, #tpu.memory_space<vmem>>, vector<128x2xf32>
    %c0_34 = arith.constant 0 : index
    %c0_35 = arith.constant 0 : index
    %391 = vector.load %arg6[%c0_34, %c0_35] : memref<128x1xf32, #tpu.memory_space<vmem>>, vector<128x1xf32>
    %392 = vector.shape_cast %391 : vector<128x1xf32> to vector<128x1xf32>
    %393 = vector.broadcast %392 : vector<128x1xf32> to vector<128x2xf32>
    %394 = vector.extract_strided_slice %390 {offsets = [0, 0], sizes = [128, 1], strides = [1, 1]} : vector<128x2xf32> to vector<128x1xf32>
    %395 = vector.extract_strided_slice %389 {offsets = [0, 0], sizes = [1, 2], strides = [1, 1]} : vector<2x2xf32> to vector<1x2xf32>
    %396 = vector.broadcast %394 : vector<128x1xf32> to vector<128x2xf32>
    %397 = vector.broadcast %395 : vector<1x2xf32> to vector<128x2xf32>
    %398 = arith.mulf %396, %397 : vector<128x2xf32>
    %399 = arith.addf %393, %398 : vector<128x2xf32>
    %400 = vector.extract_strided_slice %390 {offsets = [0, 1], sizes = [128, 1], strides = [1, 1]} : vector<128x2xf32> to vector<128x1xf32>
    %401 = vector.extract_strided_slice %389 {offsets = [1, 0], sizes = [1, 2], strides = [1, 1]} : vector<2x2xf32> to vector<1x2xf32>
    %402 = vector.broadcast %400 : vector<128x1xf32> to vector<128x2xf32>
    %403 = vector.broadcast %401 : vector<1x2xf32> to vector<128x2xf32>
    %404 = arith.mulf %402, %403 : vector<128x2xf32>
    %405 = arith.addf %399, %404 : vector<128x2xf32>
    %cst_36 = arith.constant 0.000000e+00 : f32
    %406 = vector.broadcast %cst_36 : f32 to vector<128x2xf32>
    %407 = arith.maximumf %405, %406 : vector<128x2xf32>
    %c0_37 = arith.constant 0 : index
    %c0_38 = arith.constant 0 : index
    %408 = vector.load %arg7[%c0_37, %c0_38] : memref<1x128xf32, #tpu.memory_space<vmem>>, vector<1x128xf32>
    %cst_39 = arith.constant dense<0.000000e+00> : vector<1x2xf32>
    %409 = tpu.matmul %408, %407, %cst_39 {dimension_numbers = #tpu.dot_dimension_numbers<[1], [0], [0], [1], [0, 0, 1, 1], [], []>} : vector<1x128xf32>, vector<128x2xf32>, vector<1x2xf32> -> vector<1x2xf32>
    %c0_40 = arith.constant 0 : index
    %c0_41 = arith.constant 0 : index
    %410 = vector.load %arg8[%c0_40, %c0_41] : memref<1x1xf32, #tpu.memory_space<vmem>>, vector<1x1xf32>
    %411 = vector.broadcast %410 : vector<1x1xf32> to vector<1x2xf32>
    %412 = arith.addf %409, %411 : vector<1x2xf32>
    %c0_42 = arith.constant 0 : index
    %c0_43 = arith.constant 0 : index
    %413 = vector.load %arg9[%c0_42, %c0_43] : memref<1x2xf32, #tpu.memory_space<vmem>>, vector<1x2xf32>
    tpu.vector_store %arg9[%c0_42, %c0_43], %412 {strides = array<i32>} : memref<1x2xf32, #tpu.memory_space<vmem>>, vector<1x2xf32>,
    return
  }
  func.func @transform_0(%arg0: i32) -> (i32, i32, i32) {
    %c0_i32 = arith.constant 0 : i32
    %c0_i32_0 = arith.constant 0 : i32
    %c0_i32_1 = arith.constant 0 : i32
    return %c0_i32, %c0_i32_0, %arg0 : i32, i32, i32
  }
  func.func @transform_1(%arg0: i32) -> (i32, i32) {
    %c0_i32 = arith.constant 0 : i32
    %c0_i32_0 = arith.constant 0 : i32
    %c0_i32_1 = arith.constant 0 : i32
    return %c0_i32, %c0_i32_0 : i32, i32
  }
  func.func @transform_2(%arg0: i32) -> (i32, i32) {
    %c0_i32 = arith.constant 0 : i32
    %c0_i32_0 = arith.constant 0 : i32
    %c0_i32_1 = arith.constant 0 : i32
    return %c0_i32, %c0_i32_0 : i32, i32
  }
  func.func @transform_3(%arg0: i32) -> (i32, i32) {
    %c0_i32 = arith.constant 0 : i32
    %c0_i32_0 = arith.constant 0 : i32
    %c0_i32_1 = arith.constant 0 : i32
    return %c0_i32, %c0_i32_0 : i32, i32
  }
  func.func @transform_4(%arg0: i32) -> (i32, i32) {
    %c0_i32 = arith.constant 0 : i32
    %c0_i32_0 = arith.constant 0 : i32
    %c0_i32_1 = arith.constant 0 : i32
    return %c0_i32, %c0_i32_0 : i32, i32
  }
  func.func @transform_5(%arg0: i32) -> (i32, i32) {
    %c0_i32 = arith.constant 0 : i32
    %c0_i32_0 = arith.constant 0 : i32
    %c0_i32_1 = arith.constant 0 : i32
    return %c0_i32, %c0_i32_0 : i32, i32
  }
  func.func @transform_6(%arg0: i32) -> (i32, i32) {
    %c0_i32 = arith.constant 0 : i32
    %c0_i32_0 = arith.constant 0 : i32
    %c0_i32_1 = arith.constant 0 : i32
    return %c0_i32, %c0_i32_0 : i32, i32
  }
  func.func @transform_7(%arg0: i32) -> (i32, i32) {
    %c0_i32 = arith.constant 0 : i32
    %c0_i32_0 = arith.constant 0 : i32
    %c0_i32_1 = arith.constant 0 : i32
    return %c0_i32, %c0_i32_0 : i32, i32
  }
  func.func @transform_8(%arg0: i32) -> (i32, i32) {
    %c0_i32 = arith.constant 0 : i32
    %c0_i32_0 = arith.constant 0 : i32
    return %c0_i32, %arg0 : i32, i32
  }
}

</mosaic_0001>

<llo_original>
// kernel: tpu_custom_call.1
$region0: #{tpu_custom_call.1}
  #allocation0 [shape = 'u32[]', space=smem, size = 0x4, offset = 0x4, fixed_abs, tag = 'smem constant byte address 0x4 - core index']
  #allocation1 [shape = 'u32[144,128]{1,0:T(1,128)}', space=vmem, size = 0x12000, scoped, tag = 'internal scratch']
  #allocation2 [shape = 'f32[1,1]{1,0:T(1,128)S(1)}', space=vmem, size = 0x200, scoped, tag = 'scoped memory for tpu_custom_call.1']
  %s0 = inlined_call_operand.vmem [shape: f32[8,5,2], index: 0, kind: input, shape index: {}]
  %s1 = inlined_call_operand.vmem [shape: f32[8,5], index: 1, kind: input, shape index: {}]
  %s2 = inlined_call_operand.vmem [shape: f32[8,2], index: 2, kind: input, shape index: {}]
  %s3 = inlined_call_operand.vmem [shape: f32[8,1], index: 3, kind: input, shape index: {}]
  %s4 = inlined_call_operand.vmem [shape: f32[128,2], index: 4, kind: input, shape index: {}]
  %s5 = inlined_call_operand.vmem [shape: f32[128,1], index: 5, kind: input, shape index: {}]
  %s6 = inlined_call_operand.vmem [shape: f32[1,128], index: 6, kind: input, shape index: {}]
  %s7 = inlined_call_operand.<no memory space> [shape: f32[1,1], index: 7, kind: input, shape index: {}]
  %s8 = inlined_call_operand.hbm [shape: f32[1,2], index: 8, kind: output, shape index: {}]
  %s9 = sld [smem:[#allocation0]]
  $region42: #{tpu_custom_call.1} parent=0
    _
  %s11 = ssub.s32 1, %s9
  %s12 = scalar_select 0, %s11, %s9
  %v13 = vstv %s7
  %14 = vst [vmem:[#allocation2] sm:$0x1] %v13
  $region1: #{tpu_custom_call.1} parent=0
    #allocation3 [shape = 'u8[512]{0}', space=vmem, size = 0x400, scoped, tag = 'output window, operand 0, single buffered']
    #allocation4 [shape = 's32[1]{0}', space=sflag, size = 0x4, scoped, tag = 'scoped memory for tpu_custom_call.1']
    %15 = vsyncpa [#allocation4], 0
    // Predicated region
    $region2: #{tpu_custom_call.1} parent=1 // pred_check
      _
    $region3: #{tpu_custom_call.1} parent=1 // pred_check_branch
      %17 = sbr.rel (0) target = $region5
    $region4: #{tpu_custom_call.1} parent=1 // pred_region
      _
    $region5: #{tpu_custom_call.1} parent=1 // pred_fallthru
      _
    // Predicated region
    $region6: #{tpu_custom_call.1} parent=1 // pred_check
      _
    $region7: #{tpu_custom_call.1} parent=1 // pred_check_branch
      %19 = sbr.rel (0) target = $region9
    $region8: #{tpu_custom_call.1} parent=1 // pred_region
      _
    $region9: #{tpu_custom_call.1} parent=1 // pred_fallthru
      _
    // Predicated region
    $region10: #{tpu_custom_call.1} parent=1 // pred_check
      _
    $region11: #{tpu_custom_call.1} parent=1 // pred_check_branch
      %21 = sbr.rel (0) target = $region13
    $region12: #{tpu_custom_call.1} parent=1 // pred_region
      _
    $region13: #{tpu_custom_call.1} parent=1 // pred_fallthru
      _
    // Predicated region
    $region14: #{tpu_custom_call.1} parent=1 // pred_check
      _
    $region15: #{tpu_custom_call.1} parent=1 // pred_check_branch
      %23 = sbr.rel (0) target = $region17
    $region16: #{tpu_custom_call.1} parent=1 // pred_region
      _
    $region17: #{tpu_custom_call.1} parent=1 // pred_fallthru
      _
    // Predicated region
    $region18: #{tpu_custom_call.1} parent=1 // pred_check
      _
    $region19: #{tpu_custom_call.1} parent=1 // pred_check_branch
      %25 = sbr.rel (0) target = $region21
    $region20: #{tpu_custom_call.1} parent=1 // pred_region
      _
    $region21: #{tpu_custom_call.1} parent=1 // pred_fallthru
      _
    // Predicated region
    $region22: #{tpu_custom_call.1} parent=1 // pred_check
      _
    $region23: #{tpu_custom_call.1} parent=1 // pred_check_branch
      %27 = sbr.rel (0) target = $region25
    $region24: #{tpu_custom_call.1} parent=1 // pred_region
      _
    $region25: #{tpu_custom_call.1} parent=1 // pred_fallthru
      _
    // Predicated region
    $region26: #{tpu_custom_call.1} parent=1 // pred_check
      _
    $region27: #{tpu_custom_call.1} parent=1 // pred_check_branch
      %29 = sbr.rel (0) target = $region29
    $region28: #{tpu_custom_call.1} parent=1 // pred_region
      _
    $region29: #{tpu_custom_call.1} parent=1 // pred_fallthru
      _
    // Predicated region
    $region30: #{tpu_custom_call.1} parent=1 // pred_check
      _
    $region31: #{tpu_custom_call.1} parent=1 // pred_check_branch
      %31 = sbr.rel (0) target = $region33
    $region32: #{tpu_custom_call.1} parent=1 // pred_region
      _
    $region33: #{tpu_custom_call.1} parent=1 // pred_fallthru
      _
    %v32 = vld [vmem:[%s1] sm:$0xff]
    %v33 = vld [vmem:[%s2] sm:$0xff]
    %35 = vset.pattern.permute.xlu0 0
    %36 = vperm.xlu0 %35, %v32
    %v37 = vpop.permute.xlu0 %36
    %39 = vset.pattern.permute.xlu0 1
    %40 = vperm.xlu0 %39, %v32
    %v41 = vpop.permute.xlu0 %40
    %43 = vset.pattern.permute.xlu0 2
    %44 = vperm.xlu0 %43, %v32
    %v45 = vpop.permute.xlu0 %44
    %47 = vset.pattern.permute.xlu0 3
    %48 = vperm.xlu0 %47, %v32
    %v49 = vpop.permute.xlu0 %48
    %51 = vset.pattern.permute.xlu0 4
    %52 = vperm.xlu0 %51, %v32
    %v53 = vpop.permute.xlu0 %52
    %56 = vset.pattern.permute.xlu0 0
    %57 = vperm.xlu0 %56, %v33
    %v58 = vpop.permute.xlu0 %57
    %60 = vset.pattern.permute.xlu0 1
    %61 = vperm.xlu0 %60, %v33
    %v62 = vpop.permute.xlu0 %61
    %v64 = vld [vmem:[%s3] sm:$0xff]
    %66 = vset.pattern.permute.xlu0 0
    %67 = vperm.xlu0 %66, %v64
    %v68 = vpop.permute.xlu0 %67
    %v70 = vld [vmem:[%s0] sm:$0x1f]
    %v71 = vlaneseq
    %v72 = vshrl.u32 %v71, 7
    %v73 = vsub.s32 0, %v72
    %v74 = vrot.slane %v70, %v73
    %v75 = vmul.f32 %v37, %v74
    %v76 = vadd.f32 %v68, %v75
    %v77 = vlaneseq
    %v78 = vshrl.u32 %v77, 7
    %v79 = vsub.s32 1, %v78
    %v80 = vrot.slane %v70, %v79
    %v81 = vmul.f32 %v41, %v80
    %v82 = vadd.f32 %v76, %v81
    %v83 = vlaneseq
    %v84 = vshrl.u32 %v83, 7
    %v85 = vsub.s32 2, %v84
    %v86 = vrot.slane %v70, %v85
    %v87 = vmul.f32 %v45, %v86
    %v88 = vadd.f32 %v82, %v87
    %v89 = vlaneseq
    %v90 = vshrl.u32 %v89, 7
    %v91 = vsub.s32 3, %v90
    %v92 = vrot.slane %v70, %v91
    %v93 = vmul.f32 %v49, %v92
    %v94 = vadd.f32 %v88, %v93
    %v95 = vlaneseq
    %v96 = vshrl.u32 %v95, 7
    %v97 = vsub.s32 4, %v96
    %v98 = vrot.slane %v70, %v97
    %v99 = vmul.f32 %v53, %v98
    %v100 = vadd.f32 %v94, %v99
    %v101 = vmul.f32 %v58, 0.0
    %v102 = vadd.f32 %v100, %v101
    %v103 = vmul.f32 %v62, 0.0
    %v104 = vadd.f32 %v102, %v103
    %v105 = vxor.u32 %v104, 2147483648
    %v106 = vmul.f32 %v105, 1.442695
    %v107 = vpow.pop %v106
    %v108 = vadd.f32 %v107, 1.0
    %v109 = vrcp.pop %v108
    %v110 = vmul.f32 1.0, %v109
    %v111 = vtanh.pop %v104
    %v112 = vmul.f32 %v110, 0.0
    %v114 = vrot.slane %v111, 4
    %v116 = vmul.f32 %v110, %v114
    %v118 = vrot.slane %v116, 6
    %v120 = vadd.f32 %v112, %v118
    %v121 = vtanh.pop %v120
    %v123 = vrot.slane %v121, 4
    %v125 = vmul.f32 %v110, %v123
    %s126 = scalar_lea.vmem %s0, 8
    %v127 = vld [vmem:[%s126] sm:$0x1f]
    %v128 = vlaneseq
    %v129 = vshrl.u32 %v128, 7
    %v130 = vsub.s32 0, %v129
    %v131 = vrot.slane %v127, %v130
    %v132 = vmul.f32 %v37, %v131
    %v133 = vadd.f32 %v68, %v132
    %v134 = vlaneseq
    %v135 = vshrl.u32 %v134, 7
    %v136 = vsub.s32 1, %v135
    %v137 = vrot.slane %v127, %v136
    %v138 = vmul.f32 %v41, %v137
    %v139 = vadd.f32 %v133, %v138
    %v140 = vlaneseq
    %v141 = vshrl.u32 %v140, 7
    %v142 = vsub.s32 2, %v141
    %v143 = vrot.slane %v127, %v142
    %v144 = vmul.f32 %v45, %v143
    %v145 = vadd.f32 %v139, %v144
    %v146 = vlaneseq
    %v147 = vshrl.u32 %v146, 7
    %v148 = vsub.s32 3, %v147
    %v149 = vrot.slane %v127, %v148
    %v150 = vmul.f32 %v49, %v149
    %v151 = vadd.f32 %v145, %v150
    %v152 = vlaneseq
    %v153 = vshrl.u32 %v152, 7
    %v154 = vsub.s32 4, %v153
    %v155 = vrot.slane %v127, %v154
    %v156 = vmul.f32 %v53, %v155
    %v157 = vadd.f32 %v151, %v156
    %v158 = vlaneseq
    %v159 = vshrl.u32 %v158, 7
    %v160 = vsub.s32 6, %v159
    %v161 = vrot.slane %v125, %v160
    %v162 = vmul.f32 %v58, %v161
    %v163 = vadd.f32 %v157, %v162
    %v164 = vlaneseq
    %v165 = vshrl.u32 %v164, 7
    %v166 = vsub.s32 7, %v165
    %v167 = vrot.slane %v125, %v166
    %v168 = vmul.f32 %v62, %v167
    %v169 = vadd.f32 %v163, %v168
    %v170 = vxor.u32 %v169, 2147483648
    %v171 = vmul.f32 %v170, 1.442695
    %v172 = vpow.pop %v171
    %v173 = vadd.f32 %v172, 1.0
    %v174 = vrcp.pop %v173
    %v175 = vmul.f32 1.0, %v174
    %v176 = vtanh.pop %v169
    %v177 = vmul.f32 %v175, %v120
    %v179 = vrot.slane %v176, 4
    %v181 = vmul.f32 %v175, %v179
    %v183 = vrot.slane %v181, 6
    %v185 = vadd.f32 %v177, %v183
    %v186 = vtanh.pop %v185
    %v188 = vrot.slane %v186, 4
    %v190 = vmul.f32 %v175, %v188
    %s191 = scalar_lea.vmem %s0, 16
    %v192 = vld [vmem:[%s191] sm:$0x1f]
    %v193 = vlaneseq
    %v194 = vshrl.u32 %v193, 7
    %v195 = vsub.s32 0, %v194
    %v196 = vrot.slane %v192, %v195
    %v197 = vmul.f32 %v37, %v196
    %v198 = vadd.f32 %v68, %v197
    %v199 = vlaneseq
    %v200 = vshrl.u32 %v199, 7
    %v201 = vsub.s32 1, %v200
    %v202 = vrot.slane %v192, %v201
    %v203 = vmul.f32 %v41, %v202
    %v204 = vadd.f32 %v198, %v203
    %v205 = vlaneseq
    %v206 = vshrl.u32 %v205, 7
    %v207 = vsub.s32 2, %v206
    %v208 = vrot.slane %v192, %v207
    %v209 = vmul.f32 %v45, %v208
    %v210 = vadd.f32 %v204, %v209
    %v211 = vlaneseq
    %v212 = vshrl.u32 %v211, 7
    %v213 = vsub.s32 3, %v212
    %v214 = vrot.slane %v192, %v213
    %v215 = vmul.f32 %v49, %v214
    %v216 = vadd.f32 %v210, %v215
    %v217 = vlaneseq
    %v218 = vshrl.u32 %v217, 7
    %v219 = vsub.s32 4, %v218
    %v220 = vrot.slane %v192, %v219
    %v221 = vmul.f32 %v53, %v220
    %v222 = vadd.f32 %v216, %v221
    %v223 = vlaneseq
    %v224 = vshrl.u32 %v223, 7
    %v225 = vsub.s32 6, %v224
    %v226 = vrot.slane %v190, %v225
    %v227 = vmul.f32 %v58, %v226
    %v228 = vadd.f32 %v222, %v227
    %v229 = vlaneseq
    %v230 = vshrl.u32 %v229, 7
    %v231 = vsub.s32 7, %v230
    %v232 = vrot.slane %v190, %v231
    %v233 = vmul.f32 %v62, %v232
    %v234 = vadd.f32 %v228, %v233
    %v235 = vxor.u32 %v234, 2147483648
    %v236 = vmul.f32 %v235, 1.442695
    %v237 = vpow.pop %v236
    %v238 = vadd.f32 %v237, 1.0
    %v239 = vrcp.pop %v238
    %v240 = vmul.f32 1.0, %v239
    %v241 = vtanh.pop %v234
    %v242 = vmul.f32 %v240, %v185
    %v244 = vrot.slane %v241, 4
    %v246 = vmul.f32 %v240, %v244
    %v248 = vrot.slane %v246, 6
    %v250 = vadd.f32 %v242, %v248
    %v251 = vtanh.pop %v250
    %v253 = vrot.slane %v251, 4
    %v255 = vmul.f32 %v240, %v253
    %s256 = scalar_lea.vmem %s0, 24
    %v257 = vld [vmem:[%s256] sm:$0x1f]
    %v258 = vlaneseq
    %v259 = vshrl.u32 %v258, 7
    %v260 = vsub.s32 0, %v259
    %v261 = vrot.slane %v257, %v260
    %v262 = vmul.f32 %v37, %v261
    %v263 = vadd.f32 %v68, %v262
    %v264 = vlaneseq
    %v265 = vshrl.u32 %v264, 7
    %v266 = vsub.s32 1, %v265
    %v267 = vrot.slane %v257, %v266
    %v268 = vmul.f32 %v41, %v267
    %v269 = vadd.f32 %v263, %v268
    %v270 = vlaneseq
    %v271 = vshrl.u32 %v270, 7
    %v272 = vsub.s32 2, %v271
    %v273 = vrot.slane %v257, %v272
    %v274 = vmul.f32 %v45, %v273
    %v275 = vadd.f32 %v269, %v274
    %v276 = vlaneseq
    %v277 = vshrl.u32 %v276, 7
    %v278 = vsub.s32 3, %v277
    %v279 = vrot.slane %v257, %v278
    %v280 = vmul.f32 %v49, %v279
    %v281 = vadd.f32 %v275, %v280
    %v282 = vlaneseq
    %v283 = vshrl.u32 %v282, 7
    %v284 = vsub.s32 4, %v283
    %v285 = vrot.slane %v257, %v284
    %v286 = vmul.f32 %v53, %v285
    %v287 = vadd.f32 %v281, %v286
    %v288 = vlaneseq
    %v289 = vshrl.u32 %v288, 7
    %v290 = vsub.s32 6, %v289
    %v291 = vrot.slane %v255, %v290
    %v292 = vmul.f32 %v58, %v291
    %v293 = vadd.f32 %v287, %v292
    %v294 = vlaneseq
    %v295 = vshrl.u32 %v294, 7
    %v296 = vsub.s32 7, %v295
    %v297 = vrot.slane %v255, %v296
    %v298 = vmul.f32 %v62, %v297
    %v299 = vadd.f32 %v293, %v298
    %v300 = vxor.u32 %v299, 2147483648
    %v301 = vmul.f32 %v300, 1.442695
    %v302 = vpow.pop %v301
    %v303 = vadd.f32 %v302, 1.0
    %v304 = vrcp.pop %v303
    %v305 = vmul.f32 1.0, %v304
    %v306 = vtanh.pop %v299
    %v307 = vmul.f32 %v305, %v250
    %v309 = vrot.slane %v306, 4
    %v311 = vmul.f32 %v305, %v309
    %v313 = vrot.slane %v311, 6
    %v315 = vadd.f32 %v307, %v313
    %v316 = vtanh.pop %v315
    %v318 = vrot.slane %v316, 4
    %v320 = vmul.f32 %v305, %v318
    %s321 = scalar_lea.vmem %s0, 32
    %v322 = vld [vmem:[%s321] sm:$0x1f]
    %v323 = vlaneseq
    %v324 = vshrl.u32 %v323, 7
    %v325 = vsub.s32 0, %v324
    %v326 = vrot.slane %v322, %v325
    %v327 = vmul.f32 %v37, %v326
    %v328 = vadd.f32 %v68, %v327
    %v329 = vlaneseq
    %v330 = vshrl.u32 %v329, 7
    %v331 = vsub.s32 1, %v330
    %v332 = vrot.slane %v322, %v331
    %v333 = vmul.f32 %v41, %v332
    %v334 = vadd.f32 %v328, %v333
    %v335 = vlaneseq
    %v336 = vshrl.u32 %v335, 7
    %v337 = vsub.s32 2, %v336
    %v338 = vrot.slane %v322, %v337
    %v339 = vmul.f32 %v45, %v338
    %v340 = vadd.f32 %v334, %v339
    %v341 = vlaneseq
    %v342 = vshrl.u32 %v341, 7
    %v343 = vsub.s32 3, %v342
    %v344 = vrot.slane %v322, %v343
    %v345 = vmul.f32 %v49, %v344
    %v346 = vadd.f32 %v340, %v345
    %v347 = vlaneseq
    %v348 = vshrl.u32 %v347, 7
    %v349 = vsub.s32 4, %v348
    %v350 = vrot.slane %v322, %v349
    %v351 = vmul.f32 %v53, %v350
    %v352 = vadd.f32 %v346, %v351
    %v353 = vlaneseq
    %v354 = vshrl.u32 %v353, 7
    %v355 = vsub.s32 6, %v354
    %v356 = vrot.slane %v320, %v355
    %v357 = vmul.f32 %v58, %v356
    %v358 = vadd.f32 %v352, %v357
    %v359 = vlaneseq
    %v360 = vshrl.u32 %v359, 7
    %v361 = vsub.s32 7, %v360
    %v362 = vrot.slane %v320, %v361
    %v363 = vmul.f32 %v62, %v362
    %v364 = vadd.f32 %v358, %v363
    %v365 = vxor.u32 %v364, 2147483648
    %v366 = vmul.f32 %v365, 1.442695
    %v367 = vpow.pop %v366
    %v368 = vadd.f32 %v367, 1.0
    %v369 = vrcp.pop %v368
    %v370 = vmul.f32 1.0, %v369
    %v371 = vtanh.pop %v364
    %v372 = vmul.f32 %v370, %v315
    %v374 = vrot.slane %v371, 4
    %v376 = vmul.f32 %v370, %v374
    %v378 = vrot.slane %v376, 6
    %v380 = vadd.f32 %v372, %v378
    %v381 = vtanh.pop %v380
    %v383 = vrot.slane %v381, 4
    %v385 = vmul.f32 %v370, %v383
    %s386 = scalar_lea.vmem %s0, 40
    %v387 = vld [vmem:[%s386] sm:$0x1f]
    %v388 = vlaneseq
    %v389 = vshrl.u32 %v388, 7
    %v390 = vsub.s32 0, %v389
    %v391 = vrot.slane %v387, %v390
    %v392 = vmul.f32 %v37, %v391
    %v393 = vadd.f32 %v68, %v392
    %v394 = vlaneseq
    %v395 = vshrl.u32 %v394, 7
    %v396 = vsub.s32 1, %v395
    %v397 = vrot.slane %v387, %v396
    %v398 = vmul.f32 %v41, %v397
    %v399 = vadd.f32 %v393, %v398
    %v400 = vlaneseq
    %v401 = vshrl.u32 %v400, 7
    %v402 = vsub.s32 2, %v401
    %v403 = vrot.slane %v387, %v402
    %v404 = vmul.f32 %v45, %v403
    %v405 = vadd.f32 %v399, %v404
    %v406 = vlaneseq
    %v407 = vshrl.u32 %v406, 7
    %v408 = vsub.s32 3, %v407
    %v409 = vrot.slane %v387, %v408
    %v410 = vmul.f32 %v49, %v409
    %v411 = vadd.f32 %v405, %v410
    %v412 = vlaneseq
    %v413 = vshrl.u32 %v412, 7
    %v414 = vsub.s32 4, %v413
    %v415 = vrot.slane %v387, %v414
    %v416 = vmul.f32 %v53, %v415
    %v417 = vadd.f32 %v411, %v416
    %v418 = vlaneseq
    %v419 = vshrl.u32 %v418, 7
    %v420 = vsub.s32 6, %v419
    %v421 = vrot.slane %v385, %v420
    %v422 = vmul.f32 %v58, %v421
    %v423 = vadd.f32 %v417, %v422
    %v424 = vlaneseq
    %v425 = vshrl.u32 %v424, 7
    %v426 = vsub.s32 7, %v425
    %v427 = vrot.slane %v385, %v426
    %v428 = vmul.f32 %v62, %v427
    %v429 = vadd.f32 %v423, %v428
    %v430 = vxor.u32 %v429, 2147483648
    %v431 = vmul.f32 %v430, 1.442695
    %v432 = vpow.pop %v431
    %v433 = vadd.f32 %v432, 1.0
    %v434 = vrcp.pop %v433
    %v435 = vmul.f32 1.0, %v434
    %v436 = vtanh.pop %v429
    %v437 = vmul.f32 %v435, %v380
    %v439 = vrot.slane %v436, 4
    %v441 = vmul.f32 %v435, %v439
    %v443 = vrot.slane %v441, 6
    %v445 = vadd.f32 %v437, %v443
    %v446 = vtanh.pop %v445
    %v448 = vrot.slane %v446, 4
    %v450 = vmul.f32 %v435, %v448
    %s451 = scalar_lea.vmem %s0, 48
    %v452 = vld [vmem:[%s451] sm:$0x1f]
    %v453 = vlaneseq
    %v454 = vshrl.u32 %v453, 7
    %v455 = vsub.s32 0, %v454
    %v456 = vrot.slane %v452, %v455
    %v457 = vmul.f32 %v37, %v456
    %v458 = vadd.f32 %v68, %v457
    %v459 = vlaneseq
    %v460 = vshrl.u32 %v459, 7
    %v461 = vsub.s32 1, %v460
    %v462 = vrot.slane %v452, %v461
    %v463 = vmul.f32 %v41, %v462
    %v464 = vadd.f32 %v458, %v463
    %v465 = vlaneseq
    %v466 = vshrl.u32 %v465, 7
    %v467 = vsub.s32 2, %v466
    %v468 = vrot.slane %v452, %v467
    %v469 = vmul.f32 %v45, %v468
    %v470 = vadd.f32 %v464, %v469
    %v471 = vlaneseq
    %v472 = vshrl.u32 %v471, 7
    %v473 = vsub.s32 3, %v472
    %v474 = vrot.slane %v452, %v473
    %v475 = vmul.f32 %v49, %v474
    %v476 = vadd.f32 %v470, %v475
    %v477 = vlaneseq
    %v478 = vshrl.u32 %v477, 7
    %v479 = vsub.s32 4, %v478
    %v480 = vrot.slane %v452, %v479
    %v481 = vmul.f32 %v53, %v480
    %v482 = vadd.f32 %v476, %v481
    %v483 = vlaneseq
    %v484 = vshrl.u32 %v483, 7
    %v485 = vsub.s32 6, %v484
    %v486 = vrot.slane %v450, %v485
    %v487 = vmul.f32 %v58, %v486
    %v488 = vadd.f32 %v482, %v487
    %v489 = vlaneseq
    %v490 = vshrl.u32 %v489, 7
    %v491 = vsub.s32 7, %v490
    %v492 = vrot.slane %v450, %v491
    %v493 = vmul.f32 %v62, %v492
    %v494 = vadd.f32 %v488, %v493
    %v495 = vxor.u32 %v494, 2147483648
    %v496 = vmul.f32 %v495, 1.442695
    %v497 = vpow.pop %v496
    %v498 = vadd.f32 %v497, 1.0
    %v499 = vrcp.pop %v498
    %v500 = vmul.f32 1.0, %v499
    %v501 = vtanh.pop %v494
    %v502 = vmul.f32 %v500, %v445
    %v504 = vrot.slane %v501, 4
    %v506 = vmul.f32 %v500, %v504
    %v508 = vrot.slane %v506, 6
    %v510 = vadd.f32 %v502, %v508
    %v511 = vtanh.pop %v510
    %v513 = vrot.slane %v511, 4
    %v515 = vmul.f32 %v500, %v513
    %s516 = scalar_lea.vmem %s0, 56
    %v517 = vld [vmem:[%s516] sm:$0x1f]
    %v518 = vlaneseq
    %v519 = vshrl.u32 %v518, 7
    %v520 = vsub.s32 0, %v519
    %v521 = vrot.slane %v517, %v520
    %v522 = vmul.f32 %v37, %v521
    %v523 = vadd.f32 %v68, %v522
    %v524 = vlaneseq
    %v525 = vshrl.u32 %v524, 7
    %v526 = vsub.s32 1, %v525
    %v527 = vrot.slane %v517, %v526
    %v528 = vmul.f32 %v41, %v527
    %v529 = vadd.f32 %v523, %v528
    %v530 = vlaneseq
    %v531 = vshrl.u32 %v530, 7
    %v532 = vsub.s32 2, %v531
    %v533 = vrot.slane %v517, %v532
    %v534 = vmul.f32 %v45, %v533
    %v535 = vadd.f32 %v529, %v534
    %v536 = vlaneseq
    %v537 = vshrl.u32 %v536, 7
    %v538 = vsub.s32 3, %v537
    %v539 = vrot.slane %v517, %v538
    %v540 = vmul.f32 %v49, %v539
    %v541 = vadd.f32 %v535, %v540
    %v542 = vlaneseq
    %v543 = vshrl.u32 %v542, 7
    %v544 = vsub.s32 4, %v543
    %v545 = vrot.slane %v517, %v544
    %v546 = vmul.f32 %v53, %v545
    %v547 = vadd.f32 %v541, %v546
    %v548 = vlaneseq
    %v549 = vshrl.u32 %v548, 7
    %v550 = vsub.s32 6, %v549
    %v551 = vrot.slane %v515, %v550
    %v552 = vmul.f32 %v58, %v551
    %v553 = vadd.f32 %v547, %v552
    %v554 = vlaneseq
    %v555 = vshrl.u32 %v554, 7
    %v556 = vsub.s32 7, %v555
    %v557 = vrot.slane %v515, %v556
    %v558 = vmul.f32 %v62, %v557
    %v559 = vadd.f32 %v553, %v558
    %v560 = vxor.u32 %v559, 2147483648
    %v561 = vmul.f32 %v560, 1.442695
    %v562 = vpow.pop %v561
    %v563 = vadd.f32 %v562, 1.0
    %v564 = vrcp.pop %v563
    %v565 = vmul.f32 1.0, %v564
    %v566 = vtanh.pop %v559
    %v567 = vmul.f32 %v565, %v510
    %v569 = vrot.slane %v566, 4
    %v571 = vmul.f32 %v565, %v569
    %v573 = vrot.slane %v571, 6
    %v575 = vadd.f32 %v567, %v573
    %v576 = vtanh.pop %v575
    %v578 = vrot.slane %v576, 4
    %v580 = vmul.f32 %v565, %v578
    %v581 = vmax.f32 %v580, 0.0
    %v582 = vld [vmem:[%s4] sm:$0xff]
    %v583 = vld [vmem:[%s4 + $0x8] sm:$0xff]
    %v584 = vld [vmem:[%s4 + $0x10] sm:$0xff]
    %v585 = vld [vmem:[%s4 + $0x18] sm:$0xff]
    %v586 = vld [vmem:[%s4 + $0x20] sm:$0xff]
    %v587 = vld [vmem:[%s4 + $0x28] sm:$0xff]
    %v588 = vld [vmem:[%s4 + $0x30] sm:$0xff]
    %v589 = vld [vmem:[%s4 + $0x38] sm:$0xff]
    %v590 = vld [vmem:[%s4 + $0x40] sm:$0xff]
    %v591 = vld [vmem:[%s4 + $0x48] sm:$0xff]
    %v592 = vld [vmem:[%s4 + $0x50] sm:$0xff]
    %v593 = vld [vmem:[%s4 + $0x58] sm:$0xff]
    %v594 = vld [vmem:[%s4 + $0x60] sm:$0xff]
    %v595 = vld [vmem:[%s4 + $0x68] sm:$0xff]
    %v596 = vld [vmem:[%s4 + $0x70] sm:$0xff]
    %v597 = vld [vmem:[%s4 + $0x78] sm:$0xff]
    %v598 = vld [vmem:[%s5] sm:$0xff]
    %v599 = vld [vmem:[%s5 + $0x8] sm:$0xff]
    %v600 = vld [vmem:[%s5 + $0x10] sm:$0xff]
    %v601 = vld [vmem:[%s5 + $0x18] sm:$0xff]
    %v602 = vld [vmem:[%s5 + $0x20] sm:$0xff]
    %v603 = vld [vmem:[%s5 + $0x28] sm:$0xff]
    %v604 = vld [vmem:[%s5 + $0x30] sm:$0xff]
    %v605 = vld [vmem:[%s5 + $0x38] sm:$0xff]
    %v606 = vld [vmem:[%s5 + $0x40] sm:$0xff]
    %v607 = vld [vmem:[%s5 + $0x48] sm:$0xff]
    %v608 = vld [vmem:[%s5 + $0x50] sm:$0xff]
    %v609 = vld [vmem:[%s5 + $0x58] sm:$0xff]
    %v610 = vld [vmem:[%s5 + $0x60] sm:$0xff]
    %v611 = vld [vmem:[%s5 + $0x68] sm:$0xff]
    %v612 = vld [vmem:[%s5 + $0x70] sm:$0xff]
    %v613 = vld [vmem:[%s5 + $0x78] sm:$0xff]
    %615 = vset.pattern.permute.xlu0 0
    %616 = vperm.xlu0 %615, %v598
    %v617 = vpop.permute.xlu0 %616
    %620 = vset.pattern.permute.xlu0 0
    %621 = vperm.xlu0 %620, %v599
    %v622 = vpop.permute.xlu0 %621
    %625 = vset.pattern.permute.xlu0 0
    %626 = vperm.xlu0 %625, %v600
    %v627 = vpop.permute.xlu0 %626
    %630 = vset.pattern.permute.xlu0 0
    %631 = vperm.xlu0 %630, %v601
    %v632 = vpop.permute.xlu0 %631
    %635 = vset.pattern.permute.xlu0 0
    %636 = vperm.xlu0 %635, %v602
    %v637 = vpop.permute.xlu0 %636
    %640 = vset.pattern.permute.xlu0 0
    %641 = vperm.xlu0 %640, %v603
    %v642 = vpop.permute.xlu0 %641
    %645 = vset.pattern.permute.xlu0 0
    %646 = vperm.xlu0 %645, %v604
    %v647 = vpop.permute.xlu0 %646
    %650 = vset.pattern.permute.xlu0 0
    %651 = vperm.xlu0 %650, %v605
    %v652 = vpop.permute.xlu0 %651
    %655 = vset.pattern.permute.xlu0 0
    %656 = vperm.xlu0 %655, %v606
    %v657 = vpop.permute.xlu0 %656
    %660 = vset.pattern.permute.xlu0 0
    %661 = vperm.xlu0 %660, %v607
    %v662 = vpop.permute.xlu0 %661
    %665 = vset.pattern.permute.xlu0 0
    %666 = vperm.xlu0 %665, %v608
    %v667 = vpop.permute.xlu0 %666
    %670 = vset.pattern.permute.xlu0 0
    %671 = vperm.xlu0 %670, %v609
    %v672 = vpop.permute.xlu0 %671
    %675 = vset.pattern.permute.xlu0 0
    %676 = vperm.xlu0 %675, %v610
    %v677 = vpop.permute.xlu0 %676
    %680 = vset.pattern.permute.xlu0 0
    %681 = vperm.xlu0 %680, %v611
    %v682 = vpop.permute.xlu0 %681
    %685 = vset.pattern.permute.xlu0 0
    %686 = vperm.xlu0 %685, %v612
    %v687 = vpop.permute.xlu0 %686
    %690 = vset.pattern.permute.xlu0 0
    %691 = vperm.xlu0 %690, %v613
    %v692 = vpop.permute.xlu0 %691
    %695 = vset.pattern.permute.xlu0 0
    %696 = vperm.xlu0 %695, %v582
    %v697 = vpop.permute.xlu0 %696
    %700 = vset.pattern.permute.xlu0 0
    %701 = vperm.xlu0 %700, %v583
    %v702 = vpop.permute.xlu0 %701
    %705 = vset.pattern.permute.xlu0 0
    %706 = vperm.xlu0 %705, %v584
    %v707 = vpop.permute.xlu0 %706
    %710 = vset.pattern.permute.xlu0 0
    %711 = vperm.xlu0 %710, %v585
    %v712 = vpop.permute.xlu0 %711
    %715 = vset.pattern.permute.xlu0 0
    %716 = vperm.xlu0 %715, %v586
    %v717 = vpop.permute.xlu0 %716
    %720 = vset.pattern.permute.xlu0 0
    %721 = vperm.xlu0 %720, %v587
    %v722 = vpop.permute.xlu0 %721
    %725 = vset.pattern.permute.xlu0 0
    %726 = vperm.xlu0 %725, %v588
    %v727 = vpop.permute.xlu0 %726
    %730 = vset.pattern.permute.xlu0 0
    %731 = vperm.xlu0 %730, %v589
    %v732 = vpop.permute.xlu0 %731
    %735 = vset.pattern.permute.xlu0 0
    %736 = vperm.xlu0 %735, %v590
    %v737 = vpop.permute.xlu0 %736
    %740 = vset.pattern.permute.xlu0 0
    %741 = vperm.xlu0 %740, %v591
    %v742 = vpop.permute.xlu0 %741
    %745 = vset.pattern.permute.xlu0 0
    %746 = vperm.xlu0 %745, %v592
    %v747 = vpop.permute.xlu0 %746
    %750 = vset.pattern.permute.xlu0 0
    %751 = vperm.xlu0 %750, %v593
    %v752 = vpop.permute.xlu0 %751
    %755 = vset.pattern.permute.xlu0 0
    %756 = vperm.xlu0 %755, %v594
    %v757 = vpop.permute.xlu0 %756
    %760 = vset.pattern.permute.xlu0 0
    %761 = vperm.xlu0 %760, %v595
    %v762 = vpop.permute.xlu0 %761
    %765 = vset.pattern.permute.xlu0 0
    %766 = vperm.xlu0 %765, %v596
    %v767 = vpop.permute.xlu0 %766
    %770 = vset.pattern.permute.xlu0 0
    %771 = vperm.xlu0 %770, %v597
    %v772 = vpop.permute.xlu0 %771
    %v774 = vlaneseq
    %v775 = vshrl.u32 %v774, 7
    %v776 = vsub.s32 6, %v775
    %v777 = vrot.slane %v581, %v776
    %v778 = vmul.f32 %v697, %v777
    %v779 = vmul.f32 %v702, %v777
    %v780 = vmul.f32 %v707, %v777
    %v781 = vmul.f32 %v712, %v777
    %v782 = vmul.f32 %v717, %v777
    %v783 = vmul.f32 %v722, %v777
    %v784 = vmul.f32 %v727, %v777
    %v785 = vmul.f32 %v732, %v777
    %v786 = vmul.f32 %v737, %v777
    %v787 = vmul.f32 %v742, %v777
    %v788 = vmul.f32 %v747, %v777
    %v789 = vmul.f32 %v752, %v777
    %v790 = vmul.f32 %v757, %v777
    %v791 = vmul.f32 %v762, %v777
    %v792 = vmul.f32 %v767, %v777
    %v793 = vmul.f32 %v772, %v777
    %v794 = vadd.f32 %v617, %v778
    %v795 = vadd.f32 %v622, %v779
    %v796 = vadd.f32 %v627, %v780
    %v797 = vadd.f32 %v632, %v781
    %v798 = vadd.f32 %v637, %v782
    %v799 = vadd.f32 %v642, %v783
    %v800 = vadd.f32 %v647, %v784
    %v801 = vadd.f32 %v652, %v785
    %v802 = vadd.f32 %v657, %v786
    %v803 = vadd.f32 %v662, %v787
    %v804 = vadd.f32 %v667, %v788
    %v805 = vadd.f32 %v672, %v789
    %v806 = vadd.f32 %v677, %v790
    %v807 = vadd.f32 %v682, %v791
    %v808 = vadd.f32 %v687, %v792
    %v809 = vadd.f32 %v692, %v793
    %810 = vset.pattern.permute.xlu0 1
    %811 = vperm.xlu0 %810, %v582
    %v812 = vpop.permute.xlu0 %811
    %814 = vset.pattern.permute.xlu0 1
    %815 = vperm.xlu0 %814, %v583
    %v816 = vpop.permute.xlu0 %815
    %818 = vset.pattern.permute.xlu0 1
    %819 = vperm.xlu0 %818, %v584
    %v820 = vpop.permute.xlu0 %819
    %822 = vset.pattern.permute.xlu0 1
    %823 = vperm.xlu0 %822, %v585
    %v824 = vpop.permute.xlu0 %823
    %826 = vset.pattern.permute.xlu0 1
    %827 = vperm.xlu0 %826, %v586
    %v828 = vpop.permute.xlu0 %827
    %830 = vset.pattern.permute.xlu0 1
    %831 = vperm.xlu0 %830, %v587
    %v832 = vpop.permute.xlu0 %831
    %834 = vset.pattern.permute.xlu0 1
    %835 = vperm.xlu0 %834, %v588
    %v836 = vpop.permute.xlu0 %835
    %838 = vset.pattern.permute.xlu0 1
    %839 = vperm.xlu0 %838, %v589
    %v840 = vpop.permute.xlu0 %839
    %842 = vset.pattern.permute.xlu0 1
    %843 = vperm.xlu0 %842, %v590
    %v844 = vpop.permute.xlu0 %843
    %846 = vset.pattern.permute.xlu0 1
    %847 = vperm.xlu0 %846, %v591
    %v848 = vpop.permute.xlu0 %847
    %850 = vset.pattern.permute.xlu0 1
    %851 = vperm.xlu0 %850, %v592
    %v852 = vpop.permute.xlu0 %851
    %854 = vset.pattern.permute.xlu0 1
    %855 = vperm.xlu0 %854, %v593
    %v856 = vpop.permute.xlu0 %855
    %858 = vset.pattern.permute.xlu0 1
    %859 = vperm.xlu0 %858, %v594
    %v860 = vpop.permute.xlu0 %859
    %862 = vset.pattern.permute.xlu0 1
    %863 = vperm.xlu0 %862, %v595
    %v864 = vpop.permute.xlu0 %863
    %866 = vset.pattern.permute.xlu0 1
    %867 = vperm.xlu0 %866, %v596
    %v868 = vpop.permute.xlu0 %867
    %870 = vset.pattern.permute.xlu0 1
    %871 = vperm.xlu0 %870, %v597
    %v872 = vpop.permute.xlu0 %871
    %v874 = vlaneseq
    %v875 = vshrl.u32 %v874, 7
    %v876 = vsub.s32 7, %v875
    %v877 = vrot.slane %v581, %v876
    %v878 = vmul.f32 %v812, %v877
    %v879 = vmul.f32 %v816, %v877
    %v880 = vmul.f32 %v820, %v877
    %v881 = vmul.f32 %v824, %v877
    %v882 = vmul.f32 %v828, %v877
    %v883 = vmul.f32 %v832, %v877
    %v884 = vmul.f32 %v836, %v877
    %v885 = vmul.f32 %v840, %v877
    %v886 = vmul.f32 %v844, %v877
    %v887 = vmul.f32 %v848, %v877
    %v888 = vmul.f32 %v852, %v877
    %v889 = vmul.f32 %v856, %v877
    %v890 = vmul.f32 %v860, %v877
    %v891 = vmul.f32 %v864, %v877
    %v892 = vmul.f32 %v868, %v877
    %v893 = vmul.f32 %v872, %v877
    %v894 = vadd.f32 %v794, %v878
    %v895 = vadd.f32 %v795, %v879
    %v896 = vadd.f32 %v796, %v880
    %v897 = vadd.f32 %v797, %v881
    %v898 = vadd.f32 %v798, %v882
    %v899 = vadd.f32 %v799, %v883
    %v900 = vadd.f32 %v800, %v884
    %v901 = vadd.f32 %v801, %v885
    %v902 = vadd.f32 %v802, %v886
    %v903 = vadd.f32 %v803, %v887
    %v904 = vadd.f32 %v804, %v888
    %v905 = vadd.f32 %v805, %v889
    %v906 = vadd.f32 %v806, %v890
    %v907 = vadd.f32 %v807, %v891
    %v908 = vadd.f32 %v808, %v892
    %v909 = vadd.f32 %v809, %v893
    %v910 = vmax.f32 %v894, 0.0
    %v911 = vmax.f32 %v895, 0.0
    %v912 = vmax.f32 %v896, 0.0
    %v913 = vmax.f32 %v897, 0.0
    %v914 = vmax.f32 %v898, 0.0
    %v915 = vmax.f32 %v899, 0.0
    %v916 = vmax.f32 %v900, 0.0
    %v917 = vmax.f32 %v901, 0.0
    %v918 = vmax.f32 %v902, 0.0
    %v919 = vmax.f32 %v903, 0.0
    %v920 = vmax.f32 %v904, 0.0
    %v921 = vmax.f32 %v905, 0.0
    %v922 = vmax.f32 %v906, 0.0
    %v923 = vmax.f32 %v907, 0.0
    %v924 = vmax.f32 %v908, 0.0
    %v925 = vmax.f32 %v909, 0.0
    %v926 = vld [vmem:[%s6] sm:$0x1]
    %v927 = vld [vmem:[#allocation2] sm:$0x1]
    %929 = vset.pattern.permute.xlu0 0
    %930 = vperm.xlu0 %929, %v927
    %v931 = vpop.permute.xlu0 %930
    %v933 = vlaneseq
    %v934 = vshrl.u32 %v933, 7
    %v935 = vsub.s32 0, %v934
    %v936 = vrot.slane %v931, %v935
    %937 = vmatprep.subr.mxu0 0.0
    %938 = vmatpush1.msra.mxu0 %v910
    %939 = vmatprep.subr.mxu0 0.0
    %940 = vmatpush1.msra.mxu0 %v911
    %941 = vmatprep.subr.mxu0 0.0
    %942 = vmatpush1.msra.mxu0 %v912
    %943 = vmatprep.subr.mxu0 0.0
    %944 = vmatpush1.msra.mxu0 %v913
    %945 = vmatprep.subr.mxu0 0.0
    %946 = vmatpush1.msra.mxu0 %v914
    %947 = vmatprep.subr.mxu0 0.0
    %948 = vmatpush1.msra.mxu0 %v915
    %949 = vmatprep.subr.mxu0 0.0
    %950 = vmatpush1.msra.mxu0 %v916
    %951 = vmatprep.subr.mxu0 0.0
    %952 = vmatpush1.msra.mxu0 %v917
    %953 = vmatprep.subr.mxu0 0.0
    %954 = vmatpush1.msra.mxu0 %v918
    %955 = vmatprep.subr.mxu0 0.0
    %956 = vmatpush1.msra.mxu0 %v919
    %957 = vmatprep.subr.mxu0 0.0
    %958 = vmatpush1.msra.mxu0 %v920
    %959 = vmatprep.subr.mxu0 0.0
    %960 = vmatpush1.msra.mxu0 %v921
    %961 = vmatprep.subr.mxu0 0.0
    %962 = vmatpush1.msra.mxu0 %v922
    %963 = vmatprep.subr.mxu0 0.0
    %964 = vmatpush1.msra.mxu0 %v923
    %965 = vmatprep.subr.mxu0 0.0
    %966 = vmatpush1.msra.mxu0 %v924
    %967 = vmatprep.subr.mxu0 0.0
    %968 = vmatpush1.msra.mxu0 %v925
    %969 = vmatprep.subr.mxu0 0.0
    %970 = vmatpush1.msra.mxu0 0.0
    %971 = vmatprep.subr.mxu0 0.0
    %972 = vmatpush1.msra.mxu0 0.0
    %973 = vmatprep.subr.mxu0 0.0
    %974 = vmatpush1.msra.mxu0 0.0
    %975 = vmatprep.subr.mxu0 0.0
    %976 = vmatpush1.msra.mxu0 0.0
    %977 = vmatprep.subr.mxu0 0.0
    %978 = vmatpush1.msra.mxu0 0.0
    %979 = vmatprep.subr.mxu0 0.0
    %980 = vmatpush1.msra.mxu0 0.0
    %981 = vmatprep.subr.mxu0 0.0
    %982 = vmatpush1.msra.mxu0 0.0
    %983 = vmatprep.subr.mxu0 0.0
    %984 = vmatpush1.msra.mxu0 0.0
    %985 = vmatprep.subr.mxu0 0.0
    %986 = vmatpush1.msra.mxu0 0.0
    %987 = vmatprep.subr.mxu0 0.0
    %988 = vmatpush1.msra.mxu0 0.0
    %989 = vmatprep.subr.mxu0 0.0
    %990 = vmatpush1.msra.mxu0 0.0
    %991 = vmatprep.subr.mxu0 0.0
    %992 = vmatpush1.msra.mxu0 0.0
    %993 = vmatprep.subr.mxu0 0.0
    %994 = vmatpush1.msra.mxu0 0.0
    %995 = vmatprep.subr.mxu0 0.0
    %996 = vmatpush1.msra.mxu0 0.0
    %997 = vmatprep.subr.mxu0 0.0
    %998 = vmatpush1.msra.mxu0 0.0
    %999 = vmatprep.subr.mxu0 0.0
    %1000 = vmatpush1.msra.mxu0 0.0
    %1001 = vmatprep.mubr.f32.mxu0 0.0
    %1002 = vmatmul.mubr.f32.gmra.mrb[0].mxu0 %v926
    %v1003 = vpop.f32.mrb[0].mxu0
    %v1004 = vadd.f32 %v936, %v1003
    %v1005 = vpop.f32.mrb[0].mxu0
    %1006 = vdwg.mxu0
    %vm1007 = vcmask 8192
    %1008 = vst.msk [vmem:[#allocation3] sm:$0x1] %vm1007, %v1004
    // Predicated region
    $region34: #{tpu_custom_call.1} parent=1 // pred_check
      _
    $region35: #{tpu_custom_call.1} parent=1 // pred_check_branch
      %1010 = sbr.rel (0) target = $region37
    $region36: #{tpu_custom_call.1} parent=1 // pred_region
      %s1012 = ssub.s32 16, 16
      %1013 = vsyncadd [#allocation4], %s1012
      %s1015 = sshll.u32 [#allocation3], 4
      %s1016 = int_to_ptr.vmem [resolvable:$true] %s1015
      %1018 = dma.vmem_to_hbm [thread:$0]  %s1016, 16, %s8, [#allocation4]
    $region37: #{tpu_custom_call.1} parent=1 // pred_fallthru
      _
    // Predicated region
    $region38: #{tpu_custom_call.1} parent=1 // pred_check
      _
    $region39: #{tpu_custom_call.1} parent=1 // pred_check_branch
      %1020 = sbr.rel (0) target = $region41
    $region40: #{tpu_custom_call.1} parent=1 // pred_region
      %1021 = dma.done [#allocation4], 16
    $region41: #{tpu_custom_call.1} parent=1 // pred_fallthru
      _
    %1022 = vsyncpa [#allocation4], 1

</llo_original>
